<compile_context>
chip_gen: v6e
topology: v6e:2x2x1
jax: 0.10.0
libtpu: 0.0.40
codegen_flags: <defaults>
</compile_context>

<pallas_src>
import jax
import jax.numpy as jnp
from jax import lax
from jax.experimental import pallas as pl
from jax.experimental.pallas import tpu as pltpu

INPUT_DIM = 286
HIDDEN_DIM = 512
S_DIM = 32
CLASS_NUM = 1
NEG_SLOPE = 0.2


def _leaky_relu(x, slope=NEG_SLOPE):
    # max(x, a*x) == LeakyReLU(a) for 0 < a < 1 (2 VALU ops vs 3 for where()).
    return jnp.maximum(x, slope * x)


def discriminator_kernel(x_ref, w1_ref, b1_ref, w2_ref, b2_ref, w3t_ref,
                         b3_ref, out_ref):
    """Fused 3-layer MLP on the (batch_tile, INPUT_DIM) tile resident in VMEM."""
    # Layer 1: (bt, 286) @ (286, 512); bf16 MXU operands, f32 accumulation.
    # The bf16 cast is done here (cheap VPU op) instead of a wrapper HBM pass.
    x = x_ref[...].astype(jnp.bfloat16)
    h1 = jnp.dot(x, w1_ref[...], preferred_element_type=jnp.float32)
    # Epilogue in b1's dtype: bf16 on v6e/v7x (bf16 VALUs), f32 on v5e.
    h1 = _leaky_relu(h1.astype(b1_ref.dtype) + b1_ref[...])
    # Dropout(p=0.2): identity in eval mode.
    # TODO(synk): training-mode stochastic dropout (pltpu.prng_*) not implemented.

    # Layer 2: (bt, 512) @ (512, 32); f32 accumulation, tiny f32 epilogue.
    h2 = jnp.dot(h1.astype(jnp.bfloat16), w2_ref[...],
                 preferred_element_type=jnp.float32)
    h2 = _leaky_relu(h2 + b2_ref[...])

    # Layer 3 (32 -> 1): contract the last dims of (1, 32) x (bt, 32) so the
    # result lands directly in the lane-dense (1, batch_tile) layout.
    out = lax.dot_general(
        w3t_ref[...], h2.astype(jnp.bfloat16),
        dimension_numbers=(((1,), (1,)), ((), ())),
        preferred_element_type=jnp.float32)
    out_ref[0] = (out + b3_ref[...]).astype(out_ref.dtype)


def _pick_batch_tile(batch, cap=1024):
    """>=2 balanced tiles (both v7x TCs busy), multiple of 256, capped."""
    half = -(-batch // 2)
    bt = -(-half // 256) * 256
    return max(256, min(cap, bt))


def discriminator_forward(x, params, *, batch_tile=None):
    """x: (B, INPUT_DIM). Returns validity: (B, CLASS_NUM) float32."""
    w1, b1, w2, b2, w3, b3 = params
    B, D = x.shape
    assert D == INPUT_DIM

    if batch_tile is None:
        batch_tile = _pick_batch_tile(B)
    assert batch_tile % 256 == 0

    num_tiles = pl.cdiv(B, batch_tile)
    b_pad = num_tiles * batch_tile

    # Only the batch dim is padded (no K pad, no wrapper dtype conversion).
    x_p = x if b_pad == B else jnp.pad(x, ((0, b_pad - B), (0, 0)))

    # bf16 layer-1 epilogue where bf16 VALUs exist (v6e/v7x); f32 on v5e/v5p.
    kind = jax.devices()[0].device_kind.lower()
    epi_dtype = jnp.float32 if "v5" in kind else jnp.bfloat16

    w1_c = w1.astype(jnp.bfloat16)
    b1_c = b1.astype(epi_dtype)
    w2_c = w2.astype(jnp.bfloat16)
    b2_c = b2.astype(jnp.float32)
    w3t = w3.T.astype(jnp.bfloat16)                       # (1, S_DIM)
    b3_c = b3.reshape(1, 1).astype(jnp.float32)

    grid = (num_tiles,)
    in_specs = [
        pl.BlockSpec((batch_tile, INPUT_DIM), lambda i: (i, 0)),   # x
        pl.BlockSpec((INPUT_DIM, HIDDEN_DIM), lambda i: (0, 0)),   # w1 (resident)
        pl.BlockSpec((1, HIDDEN_DIM), lambda i: (0, 0)),           # b1
        pl.BlockSpec((HIDDEN_DIM, S_DIM), lambda i: (0, 0)),       # w2
        pl.BlockSpec((1, S_DIM), lambda i: (0, 0)),                # b2
        pl.BlockSpec((1, S_DIM), lambda i: (0, 0)),                # w3^T
        pl.BlockSpec((1, 1), lambda i: (0, 0)),                    # b3
    ]
    # Lane-dense output slab: one (1, batch_tile) row of results per tile.
    out_spec = pl.BlockSpec((1, 1, batch_tile), lambda i: (i, 0, 0))

    flops = 2 * b_pad * (INPUT_DIM * HIDDEN_DIM + HIDDEN_DIM * S_DIM
                         + S_DIM * CLASS_NUM)
    bytes_accessed = (x_p.size * x_p.dtype.itemsize
                      + (w1_c.size + w2_c.size + w3t.size) * 2
                      + b1_c.size * b1_c.dtype.itemsize
                      + (b2_c.size + b3_c.size) * 4
                      + b_pad * 4)

    out = pl.pallas_call(
        discriminator_kernel,
        out_shape=jax.ShapeDtypeStruct((num_tiles, 1, batch_tile), jnp.float32),
        grid_spec=pltpu.PrefetchScalarGridSpec(
            num_scalar_prefetch=0,
            grid=grid,
            in_specs=in_specs,
            out_specs=out_spec,
        ),
        compiler_params=pltpu.CompilerParams(
            dimension_semantics=("parallel",)),
        cost_estimate=pl.CostEstimate(
            flops=flops, transcendentals=0, bytes_accessed=bytes_accessed),
    )(x_p, w1_c, b1_c, w2_c, b2_c, w3t, b3_c)

    # (num_tiles, 1, batch_tile) -> (B, 1); tile-major order matches row order.
    return out.reshape(-1)[:B, None]


def init_params(key):
    """Deterministic synthetic parameters (shapes from Discriminator.__init__)."""
    k1, k2, k3, k4, k5, k6 = jax.random.split(key, 6)

    def lin(kw, kb, fan_in, fan_out):
        bound = 1.0 / jnp.sqrt(fan_in)
        w = jax.random.uniform(kw, (fan_in, fan_out), jnp.float32, -bound, bound)
        b = jax.random.uniform(kb, (1, fan_out), jnp.float32, -bound, bound)
        return w, b

    w1, b1 = lin(k1, k2, INPUT_DIM, HIDDEN_DIM)
    w2, b2 = lin(k3, k4, HIDDEN_DIM, S_DIM)
    w3, b3 = lin(k5, k6, S_DIM, CLASS_NUM)
    return (w1, b1, w2, b2, w3, b3)


def reference_forward(x, params):
    w1, b1, w2, b2, w3, b3 = params
    h1 = _leaky_relu(x @ w1 + b1)
    h2 = _leaky_relu(h1 @ w2 + b2)
    return h2 @ w3 + b3


if __name__ == "__main__":
    key = jax.random.PRNGKey(0)
    kx, kp = jax.random.split(key)

    # Not a tile multiple on purpose: exercises batch padding; auto tile
    # selection picks batch_tile=256 -> 2 balanced grid tiles.
    B = 300
    x = jax.random.normal(kx, (B, INPUT_DIM), dtype=jnp.float32)
    params = init_params(kp)

    out = discriminator_forward(x, params)
    out = jax.block_until_ready(out)

    ref = reference_forward(x, params)
    assert out.shape == (B, CLASS_NUM)
    # bf16 MXU operands (+ bf16 layer-1 epilogue on v6e/v7x) vs full-f32 ref.
    assert jnp.allclose(out, ref, atol=5e-2, rtol=5e-2), "mismatch vs reference"

    print("KERNEL_OK")
</pallas_src>

<mosaic_0001>
module attributes {stable_mosaic.version = 11 : i64} {
  func.func @discriminator_kernel(%arg0: i32, %arg1: memref<256x286xf32, #tpu.memory_space<vmem>>, %arg2: memref<286x512xbf16, #tpu.memory_space<vmem>>, %arg3: memref<1x512xbf16, #tpu.memory_space<vmem>>, %arg4: memref<512x32xbf16, #tpu.memory_space<vmem>>, %arg5: memref<1x32xf32, #tpu.memory_space<vmem>>, %arg6: memref<1x32xbf16, #tpu.memory_space<vmem>>, %arg7: memref<1x1xf32, #tpu.memory_space<vmem>>, %arg8: memref<1x1x256xf32, #tpu.memory_space<vmem>>) attributes {dimension_semantics = [#tpu.dimension_semantics<parallel>], iteration_bounds = array<i64: 2>, scalar_prefetch = 0 : i64, scratch_operands = 0 : i64, tpu.core_type = #tpu.core_type<tc>, window_params = [{transform_indices = @transform_0, window_bounds = array<i64: 256, 286>}, {pipeline_mode = #tpu.pipeline_mode<synchronous>, transform_indices = @transform_1, window_bounds = array<i64: 286, 512>}, {pipeline_mode = #tpu.pipeline_mode<synchronous>, transform_indices = @transform_2, window_bounds = array<i64: 1, 512>}, {pipeline_mode = #tpu.pipeline_mode<synchronous>, transform_indices = @transform_3, window_bounds = array<i64: 512, 32>}, {pipeline_mode = #tpu.pipeline_mode<synchronous>, transform_indices = @transform_4, window_bounds = array<i64: 1, 32>}, {pipeline_mode = #tpu.pipeline_mode<synchronous>, transform_indices = @transform_5, window_bounds = array<i64: 1, 32>}, {pipeline_mode = #tpu.pipeline_mode<synchronous>, transform_indices = @transform_6, window_bounds = array<i64: 1, 1>}, {transform_indices = @transform_7, window_bounds = array<i64: 1, 1, 256>}]} {
    %c0 = arith.constant 0 : index
    %c0_0 = arith.constant 0 : index
    %0 = vector.load %arg1[%c0, %c0_0] : memref<256x286xf32, #tpu.memory_space<vmem>>, vector<256x286xf32>
    %1 = arith.truncf %0 : vector<256x286xf32> to vector<256x286xbf16>
    %c0_1 = arith.constant 0 : index
    %c0_2 = arith.constant 0 : index
    %2 = vector.load %arg2[%c0_1, %c0_2] : memref<286x512xbf16, #tpu.memory_space<vmem>>, vector<286x512xbf16>
    %cst = arith.constant dense<0.000000e+00> : vector<256x512xf32>
    %3 = tpu.matmul %1, %2, %cst {dimension_numbers = #tpu.dot_dimension_numbers<[1], [0], [0], [1], [0, 0, 1, 1], [], []>} : vector<256x286xbf16>, vector<286x512xbf16>, vector<256x512xf32> -> vector<256x512xf32>
    %4 = arith.truncf %3 : vector<256x512xf32> to vector<256x512xbf16>
    %c0_3 = arith.constant 0 : index
    %c0_4 = arith.constant 0 : index
    %5 = vector.load %arg3[%c0_3, %c0_4] : memref<1x512xbf16, #tpu.memory_space<vmem>>, vector<1x512xbf16>
    %6 = vector.broadcast %5 : vector<1x512xbf16> to vector<256x512xbf16>
    %7 = arith.addf %4, %6 : vector<256x512xbf16>
    %cst_5 = arith.constant 2.001950e-01 : bf16
    %8 = vector.broadcast %cst_5 : bf16 to vector<256x512xbf16>
    %9 = arith.mulf %8, %7 : vector<256x512xbf16>
    %10 = arith.maximumf %7, %9 : vector<256x512xbf16>
    %c0_6 = arith.constant 0 : index
    %c0_7 = arith.constant 0 : index
    %11 = vector.load %arg4[%c0_6, %c0_7] : memref<512x32xbf16, #tpu.memory_space<vmem>>, vector<512x32xbf16>
    %cst_8 = arith.constant dense<0.000000e+00> : vector<256x32xf32>
    %12 = tpu.matmul %10, %11, %cst_8 {dimension_numbers = #tpu.dot_dimension_numbers<[1], [0], [0], [1], [0, 0, 1, 1], [], []>} : vector<256x512xbf16>, vector<512x32xbf16>, vector<256x32xf32> -> vector<256x32xf32>
    %c0_9 = arith.constant 0 : index
    %c0_10 = arith.constant 0 : index
    %13 = vector.load %arg5[%c0_9, %c0_10] : memref<1x32xf32, #tpu.memory_space<vmem>>, vector<1x32xf32>
    %14 = vector.broadcast %13 : vector<1x32xf32> to vector<256x32xf32>
    %15 = arith.addf %12, %14 : vector<256x32xf32>
    %cst_11 = arith.constant 2.000000e-01 : f32
    %16 = vector.broadcast %cst_11 : f32 to vector<256x32xf32>
    %17 = arith.mulf %16, %15 : vector<256x32xf32>
    %18 = arith.maximumf %15, %17 : vector<256x32xf32>
    %c0_12 = arith.constant 0 : index
    %c0_13 = arith.constant 0 : index
    %19 = vector.load %arg6[%c0_12, %c0_13] : memref<1x32xbf16, #tpu.memory_space<vmem>>, vector<1x32xbf16>
    %20 = arith.truncf %18 : vector<256x32xf32> to vector<256x32xbf16>
    %cst_14 = arith.constant dense<0.000000e+00> : vector<1x256xf32>
    %21 = tpu.matmul %19, %20, %cst_14 {dimension_numbers = #tpu.dot_dimension_numbers<[1], [1], [0], [0], [0, 0, 1, 0], [], []>} : vector<1x32xbf16>, vector<256x32xbf16>, vector<1x256xf32> -> vector<1x256xf32>
    %c0_15 = arith.constant 0 : index
    %c0_16 = arith.constant 0 : index
    %22 = vector.load %arg7[%c0_15, %c0_16] : memref<1x1xf32, #tpu.memory_space<vmem>>, vector<1x1xf32>
    %23 = vector.broadcast %22 : vector<1x1xf32> to vector<1x256xf32>
    %24 = arith.addf %21, %23 : vector<1x256xf32>
    %c0_17 = arith.constant 0 : index
    %c0_18 = arith.constant 0 : index
    %c0_19 = arith.constant 0 : index
    %25 = vector.load %arg8[%c0_17, %c0_18, %c0_19] : memref<1x1x256xf32, #tpu.memory_space<vmem>>, vector<1x1x256xf32>
    %26 = vector.shape_cast %25 : vector<1x1x256xf32> to vector<1x256xf32>
    %27 = vector.shape_cast %24 : vector<1x256xf32> to vector<1x1x256xf32>
    tpu.vector_store %arg8[%c0_17, %c0_18, %c0_19], %27 {strides = array<i32>} : memref<1x1x256xf32, #tpu.memory_space<vmem>>, vector<1x1x256xf32>,
    return
  }
  func.func @transform_0(%arg0: i32) -> (i32, i32) {
    %c0_i32 = arith.constant 0 : i32
    %c0_i32_0 = arith.constant 0 : i32
    return %arg0, %c0_i32 : i32, i32
  }
  func.func @transform_1(%arg0: i32) -> (i32, i32) {
    %c0_i32 = arith.constant 0 : i32
    %c0_i32_0 = arith.constant 0 : i32
    %c0_i32_1 = arith.constant 0 : i32
    return %c0_i32, %c0_i32_0 : i32, i32
  }
  func.func @transform_2(%arg0: i32) -> (i32, i32) {
    %c0_i32 = arith.constant 0 : i32
    %c0_i32_0 = arith.constant 0 : i32
    %c0_i32_1 = arith.constant 0 : i32
    return %c0_i32, %c0_i32_0 : i32, i32
  }
  func.func @transform_3(%arg0: i32) -> (i32, i32) {
    %c0_i32 = arith.constant 0 : i32
    %c0_i32_0 = arith.constant 0 : i32
    %c0_i32_1 = arith.constant 0 : i32
    return %c0_i32, %c0_i32_0 : i32, i32
  }
  func.func @transform_4(%arg0: i32) -> (i32, i32) {
    %c0_i32 = arith.constant 0 : i32
    %c0_i32_0 = arith.constant 0 : i32
    %c0_i32_1 = arith.constant 0 : i32
    return %c0_i32, %c0_i32_0 : i32, i32
  }
  func.func @transform_5(%arg0: i32) -> (i32, i32) {
    %c0_i32 = arith.constant 0 : i32
    %c0_i32_0 = arith.constant 0 : i32
    %c0_i32_1 = arith.constant 0 : i32
    return %c0_i32, %c0_i32_0 : i32, i32
  }
  func.func @transform_6(%arg0: i32) -> (i32, i32) {
    %c0_i32 = arith.constant 0 : i32
    %c0_i32_0 = arith.constant 0 : i32
    %c0_i32_1 = arith.constant 0 : i32
    return %c0_i32, %c0_i32_0 : i32, i32
  }
  func.func @transform_7(%arg0: i32) -> (i32, i32, i32) {
    %c0_i32 = arith.constant 0 : i32
    %c0_i32_0 = arith.constant 0 : i32
    %c0_i32_1 = arith.constant 0 : i32
    return %arg0, %c0_i32, %c0_i32_0 : i32, i32, i32
  }
}

</mosaic_0001>

<llo_original>
// kernel: tpu_custom_call.1
$region0: #{tpu_custom_call.1}
  #allocation0 [shape = 'u32[]', space=smem, size = 0x4, offset = 0x4, fixed_abs, tag = 'smem constant byte address 0x4 - core index']
  #allocation1 [shape = 'u32[144,128]{1,0:T(1,128)}', space=vmem, size = 0x12000, scoped, tag = 'internal scratch']
  #allocation2 [shape = 'f32[1,1]{1,0:T(1,128)S(1)}', space=vmem, size = 0x200, scoped, tag = 'scoped memory for tpu_custom_call.1']
  %s0 = inlined_call_operand.vmem [shape: f32[512,286], index: 0, kind: input, shape index: {}]
  %s1 = inlined_call_operand.vmem [shape: bf16[286,512], index: 1, kind: input, shape index: {}]
  %s2 = inlined_call_operand.vmem [shape: bf16[1,512], index: 2, kind: input, shape index: {}]
  %s3 = inlined_call_operand.vmem [shape: bf16[512,32], index: 3, kind: input, shape index: {}]
  %s4 = inlined_call_operand.vmem [shape: f32[1,32], index: 4, kind: input, shape index: {}]
  %s5 = inlined_call_operand.vmem [shape: bf16[1,32], index: 5, kind: input, shape index: {}]
  %s6 = inlined_call_operand.<no memory space> [shape: f32[1,1], index: 6, kind: input, shape index: {}]
  %s7 = inlined_call_operand.hbm [shape: f32[2,1,256], index: 7, kind: output, shape index: {}]
  %s8 = sld [smem:[#allocation0]]
  $region61: #{tpu_custom_call.1} parent=0
    _
  %s10 = ssub.s32 1, %s8
  %s11 = scalar_select 0, %s10, %s8
  %v12 = vstv %s6
  %13 = vst [vmem:[#allocation2] sm:$0x1] %v12
  $region1: #{tpu_custom_call.1} parent=0
    #allocation3 [shape = 'u8[2048]{0}', space=vmem, size = 0x800, scoped, tag = 'output window, operand 0']
    #allocation4 [shape = 's32[2]{0}', space=sflag, size = 0x8, scoped, tag = 'scoped memory for tpu_custom_call.1']
    %14 = vsyncpa [#allocation4], 0
    %s15 = scalar_lea.sflag [#allocation4], 1
    %16 = vsyncpa %s15, 0
    loop: start=0, step=1, limit=4
    $region2: #{tpu_custom_call.1} parent=1 // loop_pre_header
      _
    $region3: #{tpu_custom_call.1} parent=1 // loop_header
      %s18 = sphi 0, %s22
      %p19 = scmp.ge.s32.totalorder %s18, 4
      %s28 = sphi 0, %s30
      %s31 = sphi 0, %s28
      %s32 = sphi 0, %s31
      %s48 = sphi 0, %s32
      %s52 = sphi 0, %s52
      %s54 = sphi 0, %s52
      %s55 = sphi 0, %s54
      %s69 = sphi 0, %s55
      %s73 = sphi 0, %s73
      %s75 = sphi 0, %s73
      %s76 = sphi 0, %s75
      %s90 = sphi 0, %s76
      %s94 = sphi 0, %s94
      %s96 = sphi 0, %s94
      %s97 = sphi 0, %s96
      %s111 = sphi 0, %s97
      %s115 = sphi 0, %s115
      %s117 = sphi 0, %s115
      %s118 = sphi 0, %s117
      %s132 = sphi 0, %s118
      %s136 = sphi 0, %s136
      %s138 = sphi 0, %s136
      %s139 = sphi 0, %s138
      %s153 = sphi 0, %s139
      %s157 = sphi 0, %s157
      %s159 = sphi 0, %s157
      %s160 = sphi 0, %s159
      %s174 = sphi 0, %s160
      %s180 = sphi 0, %s182
      %s183 = sphi 0, %s180
      %s184 = sphi 0, %s183
      %s200 = sphi 0, %s184
    $region4: #{tpu_custom_call.1} parent=1 // loop_header_branch
      %21 = sbr.rel (%p19) target = $region8
    $region5: #{tpu_custom_call.1} parent=1 // loop_body
      %s23 = ssub.s32 %s18, 1
      %s24 = ssub.s32 %s18, 2
      %s25 = sadd.s32 %s18, 1
      %s26 = ssub.s32 %s18, %s25
      %p27 = scmp.eq.s32.totalorder %s26, 0
      %s29 = sadd.s32 %s28, 1
      %s30 = scalar_select %p27, %s28, %s29
      %p33 = pneg %p27
      %p34 = scmp.eq.s32.totalorder %s18, 1
      %p35 = por %p33, %p34
      %p36 = scmp.ne.s32.totalorder %s28, %s31
      %p37 = scmp.eq.s32.totalorder %s18, 0
      %p38 = por %p36, %p37
      %p39 = scmp.ne.s32.totalorder %s28, %s31
      %p40 = scmp.eq.s32.totalorder %s23, 1
      %p41 = por %p39, %p40
      %p42 = scmp.ne.s32.totalorder %s31, %s32
      %p43 = scmp.eq.s32.totalorder %s23, 0
      %p44 = por %p42, %p43
      %p45 = scmp.ne.s32.totalorder %s31, %s32
      %p46 = scmp.eq.s32.totalorder %s24, 1
      %p47 = por %p45, %p46
      %p49 = scmp.ne.s32.totalorder %s32, %s48
      %p50 = scmp.eq.s32.totalorder %s24, 0
      %p51 = por %p49, %p50
      %s53 = sadd.s32 %s52, 1
      %p56 = scmp.eq.s32.totalorder %s18, 1
      %p57 = scmp.ne.s32.totalorder %s52, %s54
      %p58 = scmp.eq.s32.totalorder %s18, 0
      %p59 = por %p57, %p58
      %p60 = scmp.ne.s32.totalorder %s52, %s54
      %p61 = scmp.eq.s32.totalorder %s23, 1
      %p62 = por %p60, %p61
      %p63 = scmp.ne.s32.totalorder %s54, %s55
      %p64 = scmp.eq.s32.totalorder %s23, 0
      %p65 = por %p63, %p64
      %p66 = scmp.ne.s32.totalorder %s54, %s55
      %p67 = scmp.eq.s32.totalorder %s24, 1
      %p68 = por %p66, %p67
      %p70 = scmp.ne.s32.totalorder %s55, %s69
      %p71 = scmp.eq.s32.totalorder %s24, 0
      %p72 = por %p70, %p71
      %s74 = sadd.s32 %s73, 1
      %p77 = scmp.eq.s32.totalorder %s18, 1
      %p78 = scmp.ne.s32.totalorder %s73, %s75
      %p79 = scmp.eq.s32.totalorder %s18, 0
      %p80 = por %p78, %p79
      %p81 = scmp.ne.s32.totalorder %s73, %s75
      %p82 = scmp.eq.s32.totalorder %s23, 1
      %p83 = por %p81, %p82
      %p84 = scmp.ne.s32.totalorder %s75, %s76
      %p85 = scmp.eq.s32.totalorder %s23, 0
      %p86 = por %p84, %p85
      %p87 = scmp.ne.s32.totalorder %s75, %s76
      %p88 = scmp.eq.s32.totalorder %s24, 1
      %p89 = por %p87, %p88
      %p91 = scmp.ne.s32.totalorder %s76, %s90
      %p92 = scmp.eq.s32.totalorder %s24, 0
      %p93 = por %p91, %p92
      %s95 = sadd.s32 %s94, 1
      %p98 = scmp.eq.s32.totalorder %s18, 1
      %p99 = scmp.ne.s32.totalorder %s94, %s96
      %p100 = scmp.eq.s32.totalorder %s18, 0
      %p101 = por %p99, %p100
      %p102 = scmp.ne.s32.totalorder %s94, %s96
      %p103 = scmp.eq.s32.totalorder %s23, 1
      %p104 = por %p102, %p103
      %p105 = scmp.ne.s32.totalorder %s96, %s97
      %p106 = scmp.eq.s32.totalorder %s23, 0
      %p107 = por %p105, %p106
      %p108 = scmp.ne.s32.totalorder %s96, %s97
      %p109 = scmp.eq.s32.totalorder %s24, 1
      %p110 = por %p108, %p109
      %p112 = scmp.ne.s32.totalorder %s97, %s111
      %p113 = scmp.eq.s32.totalorder %s24, 0
      %p114 = por %p112, %p113
      %s116 = sadd.s32 %s115, 1
      %p119 = scmp.eq.s32.totalorder %s18, 1
      %p120 = scmp.ne.s32.totalorder %s115, %s117
      %p121 = scmp.eq.s32.totalorder %s18, 0
      %p122 = por %p120, %p121
      %p123 = scmp.ne.s32.totalorder %s115, %s117
      %p124 = scmp.eq.s32.totalorder %s23, 1
      %p125 = por %p123, %p124
      %p126 = scmp.ne.s32.totalorder %s117, %s118
      %p127 = scmp.eq.s32.totalorder %s23, 0
      %p128 = por %p126, %p127
      %p129 = scmp.ne.s32.totalorder %s117, %s118
      %p130 = scmp.eq.s32.totalorder %s24, 1
      %p131 = por %p129, %p130
      %p133 = scmp.ne.s32.totalorder %s118, %s132
      %p134 = scmp.eq.s32.totalorder %s24, 0
      %p135 = por %p133, %p134
      %s137 = sadd.s32 %s136, 1
      %p140 = scmp.eq.s32.totalorder %s18, 1
      %p141 = scmp.ne.s32.totalorder %s136, %s138
      %p142 = scmp.eq.s32.totalorder %s18, 0
      %p143 = por %p141, %p142
      %p144 = scmp.ne.s32.totalorder %s136, %s138
      %p145 = scmp.eq.s32.totalorder %s23, 1
      %p146 = por %p144, %p145
      %p147 = scmp.ne.s32.totalorder %s138, %s139
      %p148 = scmp.eq.s32.totalorder %s23, 0
      %p149 = por %p147, %p148
      %p150 = scmp.ne.s32.totalorder %s138, %s139
      %p151 = scmp.eq.s32.totalorder %s24, 1
      %p152 = por %p150, %p151
      %p154 = scmp.ne.s32.totalorder %s139, %s153
      %p155 = scmp.eq.s32.totalorder %s24, 0
      %p156 = por %p154, %p155
      %s158 = sadd.s32 %s157, 1
      %p161 = scmp.eq.s32.totalorder %s18, 1
      %p162 = scmp.ne.s32.totalorder %s157, %s159
      %p163 = scmp.eq.s32.totalorder %s18, 0
      %p164 = por %p162, %p163
      %p165 = scmp.ne.s32.totalorder %s157, %s159
      %p166 = scmp.eq.s32.totalorder %s23, 1
      %p167 = por %p165, %p166
      %p168 = scmp.ne.s32.totalorder %s159, %s160
      %p169 = scmp.eq.s32.totalorder %s23, 0
      %p170 = por %p168, %p169
      %p171 = scmp.ne.s32.totalorder %s159, %s160
      %p172 = scmp.eq.s32.totalorder %s24, 1
      %p173 = por %p171, %p172
      %p175 = scmp.ne.s32.totalorder %s160, %s174
      %p176 = scmp.eq.s32.totalorder %s24, 0
      %p177 = por %p175, %p176
      %s178 = ssub.s32 %s18, %s25
      %p179 = scmp.eq.s32.totalorder %s178, 0
      %s181 = sadd.s32 %s180, 1
      %s182 = scalar_select %p179, %s180, %s181
      %p185 = pneg %p179
      %p186 = scmp.eq.s32.totalorder %s18, 1
      %p187 = por %p185, %p186
      %p188 = scmp.ne.s32.totalorder %s180, %s183
      %p189 = scmp.eq.s32.totalorder %s18, 0
      %p190 = por %p188, %p189
      %p191 = scmp.ne.s32.totalorder %s180, %s183
      %p192 = scmp.eq.s32.totalorder %s23, 1
      %p193 = por %p191, %p192
      %p194 = scmp.ne.s32.totalorder %s183, %s184
      %p195 = scmp.eq.s32.totalorder %s23, 0
      %p196 = por %p194, %p195
      %p197 = scmp.ne.s32.totalorder %s183, %s184
      %p198 = scmp.eq.s32.totalorder %s24, 1
      %p199 = por %p197, %p198
      %p201 = scmp.ne.s32.totalorder %s184, %s200
      %p202 = scmp.eq.s32.totalorder %s24, 0
      %p203 = por %p201, %p202
      %p204 = scmp.le.s32.totalorder 1, %s18
      %p205 = scmp.lt.s32.totalorder %s18, 3
      %p206 = pnand %p204, %p205
      %p207 = pneg %p206
      // Predicated region
      $region9: #{tpu_custom_call.1} parent=5 // pred_check
        _
      $region10: #{tpu_custom_call.1} parent=5 // pred_check_branch
        %209 = sbr.rel (%p206) target = $region12
      $region11: #{tpu_custom_call.1} parent=5 // pred_region
        %s210 = ssub.s32 %s18, 1
        // Predicated region
        $region13: #{tpu_custom_call.1} parent=11 // pred_check
          %p211 = pneg %p65
        $region14: #{tpu_custom_call.1} parent=11 // pred_check_branch
          %213 = sbr.rel (%p211) target = $region16
        $region15: #{tpu_custom_call.1} parent=11 // pred_region
          _
        $region16: #{tpu_custom_call.1} parent=11 // pred_fallthru
          _
        // Predicated region
        $region17: #{tpu_custom_call.1} parent=11 // pred_check
          %p214 = pneg %p86
        $region18: #{tpu_custom_call.1} parent=11 // pred_check_branch
          %216 = sbr.rel (%p214) target = $region20
        $region19: #{tpu_custom_call.1} parent=11 // pred_region
          _
        $region20: #{tpu_custom_call.1} parent=11 // pred_fallthru
          _
        // Predicated region
        $region21: #{tpu_custom_call.1} parent=11 // pred_check
          %p217 = pneg %p107
        $region22: #{tpu_custom_call.1} parent=11 // pred_check_branch
          %219 = sbr.rel (%p217) target = $region24
        $region23: #{tpu_custom_call.1} parent=11 // pred_region
          _
        $region24: #{tpu_custom_call.1} parent=11 // pred_fallthru
          _
        // Predicated region
        $region25: #{tpu_custom_call.1} parent=11 // pred_check
          %p220 = pneg %p128
        $region26: #{tpu_custom_call.1} parent=11 // pred_check_branch
          %222 = sbr.rel (%p220) target = $region28
        $region27: #{tpu_custom_call.1} parent=11 // pred_region
          _
        $region28: #{tpu_custom_call.1} parent=11 // pred_fallthru
          _
        // Predicated region
        $region29: #{tpu_custom_call.1} parent=11 // pred_check
          %p223 = pneg %p149
        $region30: #{tpu_custom_call.1} parent=11 // pred_check_branch
          %225 = sbr.rel (%p223) target = $region32
        $region31: #{tpu_custom_call.1} parent=11 // pred_region
          _
        $region32: #{tpu_custom_call.1} parent=11 // pred_fallthru
          _
        // Predicated region
        $region33: #{tpu_custom_call.1} parent=11 // pred_check
          %p226 = pneg %p170
        $region34: #{tpu_custom_call.1} parent=11 // pred_check_branch
          %228 = sbr.rel (%p226) target = $region36
        $region35: #{tpu_custom_call.1} parent=11 // pred_region
          _
        $region36: #{tpu_custom_call.1} parent=11 // pred_fallthru
          _
      $region12: #{tpu_custom_call.1} parent=5 // pred_fallthru
        _
      %p229 = scmp.lt.s32.totalorder %s18, 2
      // Predicated region
      $region37: #{tpu_custom_call.1} parent=5 // pred_check
        %p230 = pneg %p229
      $region38: #{tpu_custom_call.1} parent=5 // pred_check_branch
        %232 = sbr.rel (%p230) target = $region40
      $region39: #{tpu_custom_call.1} parent=5 // pred_region
        // Predicated region
        $region41: #{tpu_custom_call.1} parent=39 // pred_check
          %p233 = pneg %p38
        $region42: #{tpu_custom_call.1} parent=39 // pred_check_branch
          %235 = sbr.rel (%p233) target = $region44
        $region43: #{tpu_custom_call.1} parent=39 // pred_region
          %s236 = smul.u32 32, %s18
          %p237 = scmp.lt.s32.totalorder %s236, 63
          %s238 = scalar_select %p237, %s236, 63
          %s239 = smul.addr %s238, 3
          %s240 = smul.addr %s239, 8
          %s241 = scalar_lea.vmem %s0, %s240
          %s242 = smul.u32 32, %s18
        $region44: #{tpu_custom_call.1} parent=39 // pred_fallthru
          _
      $region40: #{tpu_custom_call.1} parent=5 // pred_fallthru
        _
      %p243 = scmp.le.s32.totalorder 1, %s18
      %p244 = scmp.lt.s32.totalorder %s18, 3
      %p245 = pnand %p243, %p244
      %p246 = pneg %p245
      // Predicated region
      $region45: #{tpu_custom_call.1} parent=5 // pred_check
        _
      $region46: #{tpu_custom_call.1} parent=5 // pred_check_branch
        %248 = sbr.rel (%p245) target = $region48
      $region47: #{tpu_custom_call.1} parent=5 // pred_region
        %s249 = ssub.s32 %s18, 1
        %s250 = smul.u32 32, %s23
        %p251 = scmp.lt.s32.totalorder %s250, 63
        %s252 = scalar_select %p251, %s250, 63
        %s253 = smul.addr %s252, 3
        %s254 = smul.addr %s253, 8
        %s255 = scalar_lea.vmem %s0, %s254
        %p256 = pneg %p44
        %p257 = pneg %p41
        %p258 = pneg %p65
        %p259 = pneg %p62
        %p260 = pneg %p86
        %p261 = pneg %p83
        %p262 = pneg %p107
        %p263 = pneg %p104
        %p264 = pneg %p128
        %p265 = pneg %p125
        %p266 = pneg %p149
        %p267 = pneg %p146
        %p268 = pneg %p170
        %p269 = pneg %p167
        %p270 = pneg %p196
        %p271 = pneg %p193
        %s272 = sand.u32 %s183, 1
        %s273 = scalar_lea.sflag [#allocation4], %s272
        %s274 = sand.u32 %s183, 1
        %s275 = smul.addr %s274, 2
        %s276 = scalar_lea.vmem [#allocation3], %s275
        %s277 = smul.u32 32, %s23
        %p278 = scmp.lt.s32.totalorder %s277, 63
        %s279 = scalar_select %p278, %s277, 63
        %s280 = smul.addr %s279, 3
        %s281 = smul.addr %s280, 8
        %s282 = scalar_lea.vmem %s0, %s281
        %s283 = smul.u32 32, %s23
        %v286 = vld [vmem:[%s282] sm:$0xff]
        %v287 = vld [vmem:[%s282 + $0x8] sm:$0xff]
        %v288 = vld [vmem:[%s282 + $0x10] sm:$0xff]
        %v289 = vld [vmem:[%s282 + $0x18] sm:$0xff]
        %v290 = vld [vmem:[%s282 + $0x20] sm:$0xff]
        %v291 = vld [vmem:[%s282 + $0x28] sm:$0xff]
        %v292 = vld [vmem:[%s282 + $0x30] sm:$0xff]
        %v293 = vld [vmem:[%s282 + $0x38] sm:$0xff]
        %v294 = vld [vmem:[%s282 + $0x40] sm:$0xff]
        %v295 = vld [vmem:[%s282 + $0x48] sm:$0xff]
        %v296 = vld [vmem:[%s282 + $0x50] sm:$0xff]
        %v297 = vld [vmem:[%s282 + $0x58] sm:$0xff]
        %v298 = vld [vmem:[%s282 + $0x60] sm:$0xff]
        %v299 = vld [vmem:[%s282 + $0x68] sm:$0xff]
        %v300 = vld [vmem:[%s282 + $0x70] sm:$0xff]
        %v301 = vld [vmem:[%s282 + $0x78] sm:$0xff]
        %v302 = vld [vmem:[%s282 + $0x80] sm:$0xff]
        %v303 = vld [vmem:[%s282 + $0x88] sm:$0xff]
        %v304 = vld [vmem:[%s282 + $0x90] sm:$0xff]
        %v305 = vld [vmem:[%s282 + $0x98] sm:$0xff]
        %v306 = vld [vmem:[%s282 + $0xa0] sm:$0xff]
        %v307 = vld [vmem:[%s282 + $0xa8] sm:$0xff]
        %v308 = vld [vmem:[%s282 + $0xb0] sm:$0xff]
        %v309 = vld [vmem:[%s282 + $0xb8] sm:$0xff]
        %v310 = vld [vmem:[%s282 + $0xc0] sm:$0xff]
        %v311 = vld [vmem:[%s282 + $0xc8] sm:$0xff]
        %v312 = vld [vmem:[%s282 + $0xd0] sm:$0xff]
        %v313 = vld [vmem:[%s282 + $0xd8] sm:$0xff]
        %v314 = vld [vmem:[%s282 + $0xe0] sm:$0xff]
        %v315 = vld [vmem:[%s282 + $0xe8] sm:$0xff]
        %v316 = vld [vmem:[%s282 + $0xf0] sm:$0xff]
        %v317 = vld [vmem:[%s282 + $0xf8] sm:$0xff]
        %v318 = vld [vmem:[%s282 + $0x100] sm:$0xff]
        %v319 = vld [vmem:[%s282 + $0x108] sm:$0xff]
        %v320 = vld [vmem:[%s282 + $0x110] sm:$0xff]
        %v321 = vld [vmem:[%s282 + $0x118] sm:$0xff]
        %v322 = vld [vmem:[%s282 + $0x120] sm:$0xff]
        %v323 = vld [vmem:[%s282 + $0x128] sm:$0xff]
        %v324 = vld [vmem:[%s282 + $0x130] sm:$0xff]
        %v325 = vld [vmem:[%s282 + $0x138] sm:$0xff]
        %v326 = vld [vmem:[%s282 + $0x140] sm:$0xff]
        %v327 = vld [vmem:[%s282 + $0x148] sm:$0xff]
        %v328 = vld [vmem:[%s282 + $0x150] sm:$0xff]
        %v329 = vld [vmem:[%s282 + $0x158] sm:$0xff]
        %v330 = vld [vmem:[%s282 + $0x160] sm:$0xff]
        %v331 = vld [vmem:[%s282 + $0x168] sm:$0xff]
        %v332 = vld [vmem:[%s282 + $0x170] sm:$0xff]
        %v333 = vld [vmem:[%s282 + $0x178] sm:$0xff]
        %v334 = vld [vmem:[%s282 + $0x180] sm:$0xff]
        %v335 = vld [vmem:[%s282 + $0x188] sm:$0xff]
        %v336 = vld [vmem:[%s282 + $0x190] sm:$0xff]
        %v337 = vld [vmem:[%s282 + $0x198] sm:$0xff]
        %v338 = vld [vmem:[%s282 + $0x1a0] sm:$0xff]
        %v339 = vld [vmem:[%s282 + $0x1a8] sm:$0xff]
        %v340 = vld [vmem:[%s282 + $0x1b0] sm:$0xff]
        %v341 = vld [vmem:[%s282 + $0x1b8] sm:$0xff]
        %v342 = vld [vmem:[%s282 + $0x1c0] sm:$0xff]
        %v343 = vld [vmem:[%s282 + $0x1c8] sm:$0xff]
        %v344 = vld [vmem:[%s282 + $0x1d0] sm:$0xff]
        %v345 = vld [vmem:[%s282 + $0x1d8] sm:$0xff]
        %v346 = vld [vmem:[%s282 + $0x1e0] sm:$0xff]
        %v347 = vld [vmem:[%s282 + $0x1e8] sm:$0xff]
        %v348 = vld [vmem:[%s282 + $0x1f0] sm:$0xff]
        %v349 = vld [vmem:[%s282 + $0x1f8] sm:$0xff]
        %v350 = vld [vmem:[%s282 + $0x200] sm:$0xff]
        %v351 = vld [vmem:[%s282 + $0x208] sm:$0xff]
        %v352 = vld [vmem:[%s282 + $0x210] sm:$0xff]
        %v353 = vld [vmem:[%s282 + $0x218] sm:$0xff]
        %v354 = vld [vmem:[%s282 + $0x220] sm:$0xff]
        %v355 = vld [vmem:[%s282 + $0x228] sm:$0xff]
        %v356 = vld [vmem:[%s282 + $0x230] sm:$0xff]
        %v357 = vld [vmem:[%s282 + $0x238] sm:$0xff]
        %v358 = vld [vmem:[%s282 + $0x240] sm:$0xff]
        %v359 = vld [vmem:[%s282 + $0x248] sm:$0xff]
        %v360 = vld [vmem:[%s282 + $0x250] sm:$0xff]
        %v361 = vld [vmem:[%s282 + $0x258] sm:$0xff]
        %v362 = vld [vmem:[%s282 + $0x260] sm:$0xff]
        %v363 = vld [vmem:[%s282 + $0x268] sm:$0xff]
        %v364 = vld [vmem:[%s282 + $0x270] sm:$0xff]
        %v365 = vld [vmem:[%s282 + $0x278] sm:$0xff]
        %v366 = vld [vmem:[%s282 + $0x280] sm:$0xff]
        %v367 = vld [vmem:[%s282 + $0x288] sm:$0xff]
        %v368 = vld [vmem:[%s282 + $0x290] sm:$0xff]
        %v369 = vld [vmem:[%s282 + $0x298] sm:$0xff]
        %v370 = vld [vmem:[%s282 + $0x2a0] sm:$0xff]
        %v371 = vld [vmem:[%s282 + $0x2a8] sm:$0xff]
        %v372 = vld [vmem:[%s282 + $0x2b0] sm:$0xff]
        %v373 = vld [vmem:[%s282 + $0x2b8] sm:$0xff]
        %v374 = vld [vmem:[%s282 + $0x2c0] sm:$0xff]
        %v375 = vld [vmem:[%s282 + $0x2c8] sm:$0xff]
        %v376 = vld [vmem:[%s282 + $0x2d0] sm:$0xff]
        %v377 = vld [vmem:[%s282 + $0x2d8] sm:$0xff]
        %v378 = vld [vmem:[%s282 + $0x2e0] sm:$0xff]
        %v379 = vld [vmem:[%s282 + $0x2e8] sm:$0xff]
        %v380 = vld [vmem:[%s282 + $0x2f0] sm:$0xff]
        %v381 = vld [vmem:[%s282 + $0x2f8] sm:$0xff]
        %v382 = vpack.c.bf16 %v289, %v286
        %v383 = vpack.c.bf16 %v290, %v287
        %v384 = vpack.c.bf16 %v291, %v288
        %v385 = vpack.c.bf16 %v295, %v292
        %v386 = vpack.c.bf16 %v296, %v293
        %v387 = vpack.c.bf16 %v297, %v294
        %v388 = vpack.c.bf16 %v301, %v298
        %v389 = vpack.c.bf16 %v302, %v299
        %v390 = vpack.c.bf16 %v303, %v300
        %v391 = vpack.c.bf16 %v307, %v304
        %v392 = vpack.c.bf16 %v308, %v305
        %v393 = vpack.c.bf16 %v309, %v306
        %v394 = vpack.c.bf16 %v313, %v310
        %v395 = vpack.c.bf16 %v314, %v311
        %v396 = vpack.c.bf16 %v315, %v312
        %v397 = vpack.c.bf16 %v319, %v316
        %v398 = vpack.c.bf16 %v320, %v317
        %v399 = vpack.c.bf16 %v321, %v318
        %v400 = vpack.c.bf16 %v325, %v322
        %v401 = vpack.c.bf16 %v326, %v323
        %v402 = vpack.c.bf16 %v327, %v324
        %v403 = vpack.c.bf16 %v331, %v328
        %v404 = vpack.c.bf16 %v332, %v329
        %v405 = vpack.c.bf16 %v333, %v330
        %v406 = vpack.c.bf16 %v337, %v334
        %v407 = vpack.c.bf16 %v338, %v335
        %v408 = vpack.c.bf16 %v339, %v336
        %v409 = vpack.c.bf16 %v343, %v340
        %v410 = vpack.c.bf16 %v344, %v341
        %v411 = vpack.c.bf16 %v345, %v342
        %v412 = vpack.c.bf16 %v349, %v346
        %v413 = vpack.c.bf16 %v350, %v347
        %v414 = vpack.c.bf16 %v351, %v348
        %v415 = vpack.c.bf16 %v355, %v352
        %v416 = vpack.c.bf16 %v356, %v353
        %v417 = vpack.c.bf16 %v357, %v354
        %v418 = vpack.c.bf16 %v361, %v358
        %v419 = vpack.c.bf16 %v362, %v359
        %v420 = vpack.c.bf16 %v363, %v360
        %v421 = vpack.c.bf16 %v367, %v364
        %v422 = vpack.c.bf16 %v368, %v365
        %v423 = vpack.c.bf16 %v369, %v366
        %v424 = vpack.c.bf16 %v373, %v370
        %v425 = vpack.c.bf16 %v374, %v371
        %v426 = vpack.c.bf16 %v375, %v372
        %v427 = vpack.c.bf16 %v379, %v376
        %v428 = vpack.c.bf16 %v380, %v377
        %v429 = vpack.c.bf16 %v381, %v378
        %v430 = vld [vmem:[%s1] sm:$0xff]
        %v431 = vld [vmem:[%s1 + $0x8] sm:$0xff]
        %v432 = vld [vmem:[%s1 + $0x10] sm:$0xff]
        %v433 = vld [vmem:[%s1 + $0x18] sm:$0xff]
        %v434 = vld [vmem:[%s1 + $0x20] sm:$0xff]
        %v435 = vld [vmem:[%s1 + $0x28] sm:$0xff]
        %v436 = vld [vmem:[%s1 + $0x30] sm:$0xff]
        %v437 = vld [vmem:[%s1 + $0x38] sm:$0xff]
        %v438 = vld [vmem:[%s1 + $0x40] sm:$0xff]
        %v439 = vld [vmem:[%s1 + $0x48] sm:$0xff]
        %v440 = vld [vmem:[%s1 + $0x50] sm:$0xff]
        %v441 = vld [vmem:[%s1 + $0x58] sm:$0xff]
        %v442 = vld [vmem:[%s1 + $0x60] sm:$0xff]
        %v443 = vld [vmem:[%s1 + $0x68] sm:$0xff]
        %v444 = vld [vmem:[%s1 + $0x70] sm:$0xff]
        %v445 = vld [vmem:[%s1 + $0x78] sm:$0xff]
        %v446 = vld [vmem:[%s1 + $0x80] sm:$0xff]
        %v447 = vld [vmem:[%s1 + $0x88] sm:$0xff]
        %v448 = vld [vmem:[%s1 + $0x90] sm:$0xff]
        %v449 = vld [vmem:[%s1 + $0x98] sm:$0xff]
        %v450 = vld [vmem:[%s1 + $0xa0] sm:$0xff]
        %v451 = vld [vmem:[%s1 + $0xa8] sm:$0xff]
        %v452 = vld [vmem:[%s1 + $0xb0] sm:$0xff]
        %v453 = vld [vmem:[%s1 + $0xb8] sm:$0xff]
        %v454 = vld [vmem:[%s1 + $0xc0] sm:$0xff]
        %v455 = vld [vmem:[%s1 + $0xc8] sm:$0xff]
        %v456 = vld [vmem:[%s1 + $0xd0] sm:$0xff]
        %v457 = vld [vmem:[%s1 + $0xd8] sm:$0xff]
        %v458 = vld [vmem:[%s1 + $0xe0] sm:$0xff]
        %v459 = vld [vmem:[%s1 + $0xe8] sm:$0xff]
        %v460 = vld [vmem:[%s1 + $0xf0] sm:$0xff]
        %v461 = vld [vmem:[%s1 + $0xf8] sm:$0xff]
        %v462 = vld [vmem:[%s1 + $0x100] sm:$0xff]
        %v463 = vld [vmem:[%s1 + $0x108] sm:$0xff]
        %v464 = vld [vmem:[%s1 + $0x110] sm:$0xff]
        %v465 = vld [vmem:[%s1 + $0x118] sm:$0xff]
        %v466 = vld [vmem:[%s1 + $0x120] sm:$0xff]
        %v467 = vld [vmem:[%s1 + $0x128] sm:$0xff]
        %v468 = vld [vmem:[%s1 + $0x130] sm:$0xff]
        %v469 = vld [vmem:[%s1 + $0x138] sm:$0xff]
        %v470 = vld [vmem:[%s1 + $0x140] sm:$0xff]
        %v471 = vld [vmem:[%s1 + $0x148] sm:$0xff]
        %v472 = vld [vmem:[%s1 + $0x150] sm:$0xff]
        %v473 = vld [vmem:[%s1 + $0x158] sm:$0xff]
        %v474 = vld [vmem:[%s1 + $0x160] sm:$0xff]
        %v475 = vld [vmem:[%s1 + $0x168] sm:$0xff]
        %v476 = vld [vmem:[%s1 + $0x170] sm:$0xff]
        %v477 = vld [vmem:[%s1 + $0x178] sm:$0xff]
        %v478 = vld [vmem:[%s1 + $0x180] sm:$0xff]
        %v479 = vld [vmem:[%s1 + $0x188] sm:$0xff]
        %v480 = vld [vmem:[%s1 + $0x190] sm:$0xff]
        %v481 = vld [vmem:[%s1 + $0x198] sm:$0xff]
        %v482 = vld [vmem:[%s1 + $0x1a0] sm:$0xff]
        %v483 = vld [vmem:[%s1 + $0x1a8] sm:$0xff]
        %v484 = vld [vmem:[%s1 + $0x1b0] sm:$0xff]
        %v485 = vld [vmem:[%s1 + $0x1b8] sm:$0xff]
        %v486 = vld [vmem:[%s1 + $0x1c0] sm:$0xff]
        %v487 = vld [vmem:[%s1 + $0x1c8] sm:$0xff]
        %v488 = vld [vmem:[%s1 + $0x1d0] sm:$0xff]
        %v489 = vld [vmem:[%s1 + $0x1d8] sm:$0xff]
        %v490 = vld [vmem:[%s1 + $0x1e0] sm:$0xff]
        %v491 = vld [vmem:[%s1 + $0x1e8] sm:$0xff]
        %v492 = vld [vmem:[%s1 + $0x1f0] sm:$0xff]
        %v493 = vld [vmem:[%s1 + $0x1f8] sm:$0xff]
        %v494 = vld [vmem:[%s1 + $0x200] sm:$0xff]
        %v495 = vld [vmem:[%s1 + $0x208] sm:$0xff]
        %v496 = vld [vmem:[%s1 + $0x210] sm:$0xff]
        %v497 = vld [vmem:[%s1 + $0x218] sm:$0xff]
        %v498 = vld [vmem:[%s1 + $0x220] sm:$0xff]
        %v499 = vld [vmem:[%s1 + $0x228] sm:$0xff]
        %v500 = vld [vmem:[%s1 + $0x230] sm:$0x77]
        %v501 = vld [vmem:[%s1 + $0x238] sm:$0x77]
        %v574 = vunpack.c.l.b16 %v430
        %v575 = vunpack.c.h.b16 %v430
        %v576 = vunpack.c.l.b16 %v431
        %v577 = vunpack.c.h.b16 %v431
        %v578 = vunpack.c.l.b16 %v432
        %v579 = vunpack.c.h.b16 %v432
        %v580 = vunpack.c.l.b16 %v433
        %v581 = vunpack.c.h.b16 %v433
        %v582 = vunpack.c.l.b16 %v434
        %v583 = vunpack.c.h.b16 %v434
        %v584 = vunpack.c.l.b16 %v435
        %v585 = vunpack.c.h.b16 %v435
        %v586 = vunpack.c.l.b16 %v436
        %v587 = vunpack.c.h.b16 %v436
        %v588 = vunpack.c.l.b16 %v437
        %v589 = vunpack.c.h.b16 %v437
        %v590 = vunpack.c.l.b16 %v438
        %v591 = vunpack.c.h.b16 %v438
        %v592 = vunpack.c.l.b16 %v439
        %v593 = vunpack.c.h.b16 %v439
        %v594 = vunpack.c.l.b16 %v440
        %v595 = vunpack.c.h.b16 %v440
        %v596 = vunpack.c.l.b16 %v441
        %v597 = vunpack.c.h.b16 %v441
        %v598 = vunpack.c.l.b16 %v442
        %v599 = vunpack.c.h.b16 %v442
        %v600 = vunpack.c.l.b16 %v443
        %v601 = vunpack.c.h.b16 %v443
        %v602 = vunpack.c.l.b16 %v444
        %v603 = vunpack.c.h.b16 %v444
        %v604 = vunpack.c.l.b16 %v445
        %v605 = vunpack.c.h.b16 %v445
        %v606 = vunpack.c.l.b16 %v446
        %v607 = vunpack.c.h.b16 %v446
        %v608 = vunpack.c.l.b16 %v447
        %v609 = vunpack.c.h.b16 %v447
        %v610 = vunpack.c.l.b16 %v448
        %v611 = vunpack.c.h.b16 %v448
        %v612 = vunpack.c.l.b16 %v449
        %v613 = vunpack.c.h.b16 %v449
        %v614 = vunpack.c.l.b16 %v450
        %v615 = vunpack.c.h.b16 %v450
        %v616 = vunpack.c.l.b16 %v451
        %v617 = vunpack.c.h.b16 %v451
        %v618 = vunpack.c.l.b16 %v452
        %v619 = vunpack.c.h.b16 %v452
        %v620 = vunpack.c.l.b16 %v453
        %v621 = vunpack.c.h.b16 %v453
        %v622 = vunpack.c.l.b16 %v454
        %v623 = vunpack.c.h.b16 %v454
        %v624 = vunpack.c.l.b16 %v455
        %v625 = vunpack.c.h.b16 %v455
        %v626 = vunpack.c.l.b16 %v456
        %v627 = vunpack.c.h.b16 %v456
        %v628 = vunpack.c.l.b16 %v457
        %v629 = vunpack.c.h.b16 %v457
        %v630 = vunpack.c.l.b16 %v458
        %v631 = vunpack.c.h.b16 %v458
        %v632 = vunpack.c.l.b16 %v459
        %v633 = vunpack.c.h.b16 %v459
        %v634 = vunpack.c.l.b16 %v460
        %v635 = vunpack.c.h.b16 %v460
        %v636 = vunpack.c.l.b16 %v461
        %v637 = vunpack.c.h.b16 %v461
        %v638 = vunpack.c.l.b16 %v462
        %v639 = vunpack.c.h.b16 %v462
        %v640 = vunpack.c.l.b16 %v463
        %v641 = vunpack.c.h.b16 %v463
        %v642 = vunpack.c.l.b16 %v464
        %v643 = vunpack.c.h.b16 %v464
        %v644 = vunpack.c.l.b16 %v465
        %v645 = vunpack.c.h.b16 %v465
        %v646 = vunpack.c.l.b16 %v466
        %v647 = vunpack.c.h.b16 %v466
        %v648 = vunpack.c.l.b16 %v467
        %v649 = vunpack.c.h.b16 %v467
        %v650 = vunpack.c.l.b16 %v468
        %v651 = vunpack.c.h.b16 %v468
        %v652 = vunpack.c.l.b16 %v469
        %v653 = vunpack.c.h.b16 %v469
        %v654 = vunpack.c.l.b16 %v470
        %v655 = vunpack.c.h.b16 %v470
        %v656 = vunpack.c.l.b16 %v471
        %v657 = vunpack.c.h.b16 %v471
        %v658 = vunpack.c.l.b16 %v472
        %v659 = vunpack.c.h.b16 %v472
        %v660 = vunpack.c.l.b16 %v473
        %v661 = vunpack.c.h.b16 %v473
        %v662 = vunpack.c.l.b16 %v474
        %v663 = vunpack.c.h.b16 %v474
        %v664 = vunpack.c.l.b16 %v475
        %v665 = vunpack.c.h.b16 %v475
        %v666 = vunpack.c.l.b16 %v476
        %v667 = vunpack.c.h.b16 %v476
        %v668 = vunpack.c.l.b16 %v477
        %v669 = vunpack.c.h.b16 %v477
        %v670 = vunpack.c.l.b16 %v478
        %v671 = vunpack.c.h.b16 %v478
        %v672 = vunpack.c.l.b16 %v479
        %v673 = vunpack.c.h.b16 %v479
        %v674 = vunpack.c.l.b16 %v480
        %v675 = vunpack.c.h.b16 %v480
        %v676 = vunpack.c.l.b16 %v481
        %v677 = vunpack.c.h.b16 %v481
        %v678 = vunpack.c.l.b16 %v482
        %v679 = vunpack.c.h.b16 %v482
        %v680 = vunpack.c.l.b16 %v483
        %v681 = vunpack.c.h.b16 %v483
        %v682 = vunpack.c.l.b16 %v484
        %v683 = vunpack.c.h.b16 %v484
        %v684 = vunpack.c.l.b16 %v485
        %v685 = vunpack.c.h.b16 %v485
        %v686 = vunpack.c.l.b16 %v486
        %v687 = vunpack.c.h.b16 %v486
        %v688 = vunpack.c.l.b16 %v487
        %v689 = vunpack.c.h.b16 %v487
        %v690 = vunpack.c.l.b16 %v488
        %v691 = vunpack.c.h.b16 %v488
        %v692 = vunpack.c.l.b16 %v489
        %v693 = vunpack.c.h.b16 %v489
        %v694 = vunpack.c.l.b16 %v490
        %v695 = vunpack.c.h.b16 %v490
        %v696 = vunpack.c.l.b16 %v491
        %v697 = vunpack.c.h.b16 %v491
        %v698 = vunpack.c.l.b16 %v492
        %v699 = vunpack.c.h.b16 %v492
        %v700 = vunpack.c.l.b16 %v493
        %v701 = vunpack.c.h.b16 %v493
        %v702 = vunpack.c.l.b16 %v494
        %v703 = vunpack.c.h.b16 %v494
        %v704 = vunpack.c.l.b16 %v495
        %v705 = vunpack.c.h.b16 %v495
        %v706 = vunpack.c.l.b16 %v496
        %v707 = vunpack.c.h.b16 %v496
        %v708 = vunpack.c.l.b16 %v497
        %v709 = vunpack.c.h.b16 %v497
        %v710 = vunpack.c.l.b16 %v498
        %v711 = vunpack.c.h.b16 %v498
        %v712 = vunpack.c.l.b16 %v499
        %v713 = vunpack.c.h.b16 %v499
        %v714 = vunpack.c.l.b16 %v500
        %v715 = vunpack.c.h.b16 %v500
        %v716 = vunpack.c.l.b16 %v501
        %v717 = vunpack.c.h.b16 %v501
        %v718 = vpack.c.b16 %v578, %v574
        %v719 = vpack.c.b16 %v579, %v575
        %v720 = vpack.c.b16 %v580, %v576
        %v721 = vpack.c.b16 %v581, %v577
        %v722 = vpack.c.b16 %v586, %v582
        %v723 = vpack.c.b16 %v587, %v583
        %v724 = vpack.c.b16 %v588, %v584
        %v725 = vpack.c.b16 %v589, %v585
        %v726 = vpack.c.b16 %v594, %v590
        %v727 = vpack.c.b16 %v595, %v591
        %v728 = vpack.c.b16 %v596, %v592
        %v729 = vpack.c.b16 %v597, %v593
        %v730 = vpack.c.b16 %v602, %v598
        %v731 = vpack.c.b16 %v603, %v599
        %v732 = vpack.c.b16 %v604, %v600
        %v733 = vpack.c.b16 %v605, %v601
        %v734 = vpack.c.b16 %v610, %v606
        %v735 = vpack.c.b16 %v611, %v607
        %v736 = vpack.c.b16 %v612, %v608
        %v737 = vpack.c.b16 %v613, %v609
        %v738 = vpack.c.b16 %v618, %v614
        %v739 = vpack.c.b16 %v619, %v615
        %v740 = vpack.c.b16 %v620, %v616
        %v741 = vpack.c.b16 %v621, %v617
        %v742 = vpack.c.b16 %v626, %v622
        %v743 = vpack.c.b16 %v627, %v623
        %v744 = vpack.c.b16 %v628, %v624
        %v745 = vpack.c.b16 %v629, %v625
        %v746 = vpack.c.b16 %v634, %v630
        %v747 = vpack.c.b16 %v635, %v631
        %v748 = vpack.c.b16 %v636, %v632
        %v749 = vpack.c.b16 %v637, %v633
        %v750 = vpack.c.b16 %v642, %v638
        %v751 = vpack.c.b16 %v643, %v639
        %v752 = vpack.c.b16 %v644, %v640
        %v753 = vpack.c.b16 %v645, %v641
        %v754 = vpack.c.b16 %v650, %v646
        %v755 = vpack.c.b16 %v651, %v647
        %v756 = vpack.c.b16 %v652, %v648
        %v757 = vpack.c.b16 %v653, %v649
        %v758 = vpack.c.b16 %v658, %v654
        %v759 = vpack.c.b16 %v659, %v655
        %v760 = vpack.c.b16 %v660, %v656
        %v761 = vpack.c.b16 %v661, %v657
        %v762 = vpack.c.b16 %v666, %v662
        %v763 = vpack.c.b16 %v667, %v663
        %v764 = vpack.c.b16 %v668, %v664
        %v765 = vpack.c.b16 %v669, %v665
        %v766 = vpack.c.b16 %v674, %v670
        %v767 = vpack.c.b16 %v675, %v671
        %v768 = vpack.c.b16 %v676, %v672
        %v769 = vpack.c.b16 %v677, %v673
        %v770 = vpack.c.b16 %v682, %v678
        %v771 = vpack.c.b16 %v683, %v679
        %v772 = vpack.c.b16 %v684, %v680
        %v773 = vpack.c.b16 %v685, %v681
        %v774 = vpack.c.b16 %v690, %v686
        %v775 = vpack.c.b16 %v691, %v687
        %v776 = vpack.c.b16 %v692, %v688
        %v777 = vpack.c.b16 %v693, %v689
        %v778 = vpack.c.b16 %v698, %v694
        %v779 = vpack.c.b16 %v699, %v695
        %v780 = vpack.c.b16 %v700, %v696
        %v781 = vpack.c.b16 %v701, %v697
        %v782 = vpack.c.b16 %v706, %v702
        %v783 = vpack.c.b16 %v707, %v703
        %v784 = vpack.c.b16 %v708, %v704
        %v785 = vpack.c.b16 %v709, %v705
        %v786 = vpack.c.b16 %v714, %v710
        %v787 = vpack.c.b16 %v715, %v711
        %v788 = vpack.c.b16 %v716, %v712
        %v789 = vpack.c.b16 %v717, %v713
        %vm858 = vcmask 244736
        %v860 = vsel %vm858, %v384, 0
        %v863 = vsel %vm858, %v387, 0
        %v866 = vsel %vm858, %v390, 0
        %v869 = vsel %vm858, %v393, 0
        %v872 = vsel %vm858, %v396, 0
        %v875 = vsel %vm858, %v399, 0
        %v878 = vsel %vm858, %v402, 0
        %v881 = vsel %vm858, %v405, 0
        %v884 = vsel %vm858, %v408, 0
        %v887 = vsel %vm858, %v411, 0
        %v890 = vsel %vm858, %v414, 0
        %v893 = vsel %vm858, %v417, 0
        %v896 = vsel %vm858, %v420, 0
        %v899 = vsel %vm858, %v423, 0
        %v902 = vsel %vm858, %v426, 0
        %v905 = vsel %vm858, %v429, 0
        %vm907 = vcmask 1046528
        %v909 = vsel %vm907, %v786, 0
        %v912 = vsel %vm907, %v787, 0
        %v915 = vsel %vm907, %v788, 0
        %v918 = vsel %vm907, %v789, 0
        %920 = vmatprep.subr.bf16.mxu0 %v747
        %921 = vmatpush1.bf16.msra.mxu0 %v746
        %922 = vmatprep.subr.bf16.mxu0 %v743
        %923 = vmatpush1.bf16.msra.mxu0 %v742
        %924 = vmatprep.subr.bf16.mxu0 %v739
        %925 = vmatpush1.bf16.msra.mxu0 %v738
        %926 = vmatprep.subr.bf16.mxu0 %v735
        %927 = vmatpush1.bf16.msra.mxu0 %v734
        %928 = vmatprep.subr.bf16.mxu0 %v731
        %929 = vmatpush1.bf16.msra.mxu0 %v730
        %930 = vmatprep.subr.bf16.mxu0 %v727
        %931 = vmatpush1.bf16.msra.mxu0 %v726
        %932 = vmatprep.subr.bf16.mxu0 %v723
        %933 = vmatpush1.bf16.msra.mxu0 %v722
        %934 = vmatprep.subr.bf16.mxu0 %v719
        %935 = vmatpush1.bf16.msra.mxu0 %v718
        %936 = vmatprep.subr.bf16.mxu0 %v779
        %937 = vmatpush2.bf16.msra.mxu0 %v778
        %938 = vmatprep.subr.bf16.mxu0 %v775
        %939 = vmatpush2.bf16.msra.mxu0 %v774
        %940 = vmatprep.subr.bf16.mxu0 %v771
        %941 = vmatpush2.bf16.msra.mxu0 %v770
        %942 = vmatprep.subr.bf16.mxu0 %v767
        %943 = vmatpush2.bf16.msra.mxu0 %v766
        %944 = vmatprep.subr.bf16.mxu0 %v763
        %945 = vmatpush2.bf16.msra.mxu0 %v762
        %946 = vmatprep.subr.bf16.mxu0 %v759
        %947 = vmatpush2.bf16.msra.mxu0 %v758
        %948 = vmatprep.subr.bf16.mxu0 %v755
        %949 = vmatpush2.bf16.msra.mxu0 %v754
        %950 = vmatprep.subr.bf16.mxu0 %v751
        %951 = vmatpush2.bf16.msra.mxu0 %v750
        %952 = vmatprep.mubr.bf16.mxu0 %v383
        %953 = vmatmul.mubr.bf16.gmra.mxu0 %v382
        %v954 = vpop.f32.mrf.mxu0
        %v955 = vadd.f32 0.0, %v954
        %v956 = vpop.f32.mrf.mxu0
        %v957 = vadd.f32 0.0, %v956
        %v958 = vpop.f32.mrf.mxu0
        %v959 = vadd.f32 0.0, %v958
        %v960 = vpop.f32.mrf.mxu0
        %v961 = vadd.f32 0.0, %v960
        %962 = vmatprep.mubr.bf16.mxu0 %v386
        %963 = vmatmul.mubr.bf16.gmra.mxu0 %v385
        %v964 = vpop.f32.mrf.mxu0
        %v965 = vadd.f32 0.0, %v964
        %v966 = vpop.f32.mrf.mxu0
        %v967 = vadd.f32 0.0, %v966
        %v968 = vpop.f32.mrf.mxu0
        %v969 = vadd.f32 0.0, %v968
        %v970 = vpop.f32.mrf.mxu0
        %v971 = vadd.f32 0.0, %v970
        %972 = vmatprep.mubr.bf16.mxu0 %v389
        %973 = vmatmul.mubr.bf16.gmra.mxu0 %v388
        %v974 = vpop.f32.mrf.mxu0
        %v975 = vadd.f32 0.0, %v974
        %v976 = vpop.f32.mrf.mxu0
        %v977 = vadd.f32 0.0, %v976
        %v978 = vpop.f32.mrf.mxu0
        %v979 = vadd.f32 0.0, %v978
        %v980 = vpop.f32.mrf.mxu0
        %v981 = vadd.f32 0.0, %v980
        %982 = vmatprep.mubr.bf16.mxu0 %v392
        %983 = vmatmul.mubr.bf16.gmra.mxu0 %v391
        %v984 = vpop.f32.mrf.mxu0
        %v985 = vadd.f32 0.0, %v984
        %v986 = vpop.f32.mrf.mxu0
        %v987 = vadd.f32 0.0, %v986
        %v988 = vpop.f32.mrf.mxu0
        %v989 = vadd.f32 0.0, %v988
        %v990 = vpop.f32.mrf.mxu0
        %v991 = vadd.f32 0.0, %v990
        %992 = vmatprep.mubr.bf16.mxu0 %v395
        %993 = vmatmul.mubr.bf16.gmra.mxu0 %v394
        %v994 = vpop.f32.mrf.mxu0
        %v995 = vadd.f32 0.0, %v994
        %v996 = vpop.f32.mrf.mxu0
        %v997 = vadd.f32 0.0, %v996
        %v998 = vpop.f32.mrf.mxu0
        %v999 = vadd.f32 0.0, %v998
        %v1000 = vpop.f32.mrf.mxu0
        %v1001 = vadd.f32 0.0, %v1000
        %1002 = vmatprep.mubr.bf16.mxu0 %v398
        %1003 = vmatmul.mubr.bf16.gmra.mxu0 %v397
        %v1004 = vpop.f32.mrf.mxu0
        %v1005 = vadd.f32 0.0, %v1004
        %v1006 = vpop.f32.mrf.mxu0
        %v1007 = vadd.f32 0.0, %v1006
        %v1008 = vpop.f32.mrf.mxu0
        %v1009 = vadd.f32 0.0, %v1008
        %v1010 = vpop.f32.mrf.mxu0
        %v1011 = vadd.f32 0.0, %v1010
        %1012 = vmatprep.mubr.bf16.mxu0 %v401
        %1013 = vmatmul.mubr.bf16.gmra.mxu0 %v400
        %v1014 = vpop.f32.mrf.mxu0
        %v1015 = vadd.f32 0.0, %v1014
        %v1016 = vpop.f32.mrf.mxu0
        %v1017 = vadd.f32 0.0, %v1016
        %v1018 = vpop.f32.mrf.mxu0
        %v1019 = vadd.f32 0.0, %v1018
        %v1020 = vpop.f32.mrf.mxu0
        %v1021 = vadd.f32 0.0, %v1020
        %1022 = vmatprep.mubr.bf16.mxu0 %v404
        %1023 = vmatmul.mubr.bf16.gmra.mxu0 %v403
        %v1024 = vpop.f32.mrf.mxu0
        %v1025 = vadd.f32 0.0, %v1024
        %v1026 = vpop.f32.mrf.mxu0
        %v1027 = vadd.f32 0.0, %v1026
        %v1028 = vpop.f32.mrf.mxu0
        %v1029 = vadd.f32 0.0, %v1028
        %v1030 = vpop.f32.mrf.mxu0
        %v1031 = vadd.f32 0.0, %v1030
        %1032 = vmatprep.mubr.bf16.mxu0 %v407
        %1033 = vmatmul.mubr.bf16.gmra.mxu0 %v406
        %v1034 = vpop.f32.mrf.mxu0
        %v1035 = vadd.f32 0.0, %v1034
        %v1036 = vpop.f32.mrf.mxu0
        %v1037 = vadd.f32 0.0, %v1036
        %v1038 = vpop.f32.mrf.mxu0
        %v1039 = vadd.f32 0.0, %v1038
        %v1040 = vpop.f32.mrf.mxu0
        %v1041 = vadd.f32 0.0, %v1040
        %1042 = vmatprep.mubr.bf16.mxu0 %v410
        %1043 = vmatmul.mubr.bf16.gmra.mxu0 %v409
        %v1044 = vpop.f32.mrf.mxu0
        %v1045 = vadd.f32 0.0, %v1044
        %v1046 = vpop.f32.mrf.mxu0
        %v1047 = vadd.f32 0.0, %v1046
        %v1048 = vpop.f32.mrf.mxu0
        %v1049 = vadd.f32 0.0, %v1048
        %v1050 = vpop.f32.mrf.mxu0
        %v1051 = vadd.f32 0.0, %v1050
        %1052 = vmatprep.mubr.bf16.mxu0 %v413
        %1053 = vmatmul.mubr.bf16.gmra.mxu0 %v412
        %v1054 = vpop.f32.mrf.mxu0
        %v1055 = vadd.f32 0.0, %v1054
        %v1056 = vpop.f32.mrf.mxu0
        %v1057 = vadd.f32 0.0, %v1056
        %v1058 = vpop.f32.mrf.mxu0
        %v1059 = vadd.f32 0.0, %v1058
        %v1060 = vpop.f32.mrf.mxu0
        %v1061 = vadd.f32 0.0, %v1060
        %1062 = vmatprep.mubr.bf16.mxu0 %v416
        %1063 = vmatmul.mubr.bf16.gmra.mxu0 %v415
        %v1064 = vpop.f32.mrf.mxu0
        %v1065 = vadd.f32 0.0, %v1064
        %v1066 = vpop.f32.mrf.mxu0
        %v1067 = vadd.f32 0.0, %v1066
        %v1068 = vpop.f32.mrf.mxu0
        %v1069 = vadd.f32 0.0, %v1068
        %v1070 = vpop.f32.mrf.mxu0
        %v1071 = vadd.f32 0.0, %v1070
        %1072 = vmatprep.mubr.bf16.mxu0 %v419
        %1073 = vmatmul.mubr.bf16.gmra.mxu0 %v418
        %v1074 = vpop.f32.mrf.mxu0
        %v1075 = vadd.f32 0.0, %v1074
        %v1076 = vpop.f32.mrf.mxu0
        %v1077 = vadd.f32 0.0, %v1076
        %v1078 = vpop.f32.mrf.mxu0
        %v1079 = vadd.f32 0.0, %v1078
        %v1080 = vpop.f32.mrf.mxu0
        %v1081 = vadd.f32 0.0, %v1080
        %1082 = vmatprep.mubr.bf16.mxu0 %v422
        %1083 = vmatmul.mubr.bf16.gmra.mxu0 %v421
        %v1084 = vpop.f32.mrf.mxu0
        %v1085 = vadd.f32 0.0, %v1084
        %v1086 = vpop.f32.mrf.mxu0
        %v1087 = vadd.f32 0.0, %v1086
        %v1088 = vpop.f32.mrf.mxu0
        %v1089 = vadd.f32 0.0, %v1088
        %v1090 = vpop.f32.mrf.mxu0
        %v1091 = vadd.f32 0.0, %v1090
        %1092 = vmatprep.mubr.bf16.mxu0 %v425
        %1093 = vmatmul.mubr.bf16.gmra.mxu0 %v424
        %v1094 = vpop.f32.mrf.mxu0
        %v1095 = vadd.f32 0.0, %v1094
        %v1096 = vpop.f32.mrf.mxu0
        %v1097 = vadd.f32 0.0, %v1096
        %v1098 = vpop.f32.mrf.mxu0
        %v1099 = vadd.f32 0.0, %v1098
        %v1100 = vpop.f32.mrf.mxu0
        %v1101 = vadd.f32 0.0, %v1100
        %1102 = vmatprep.mubr.bf16.mxu0 %v428
        %1103 = vmatmul.mubr.bf16.gmra.mxu0 %v427
        %v1104 = vpop.f32.mrf.mxu0
        %v1105 = vadd.f32 0.0, %v1104
        %v1106 = vpop.f32.mrf.mxu0
        %v1107 = vadd.f32 0.0, %v1106
        %v1108 = vpop.f32.mrf.mxu0
        %v1109 = vadd.f32 0.0, %v1108
        %v1110 = vpop.f32.mrf.mxu0
        %v1111 = vadd.f32 0.0, %v1110
        %1112 = vdwg.mxu0
        %1113 = vmatprep.subr.bf16.mxu0 0
        %1114 = vmatpush1.bf16.msra.mxu0 0
        %1115 = vmatprep.subr.bf16.mxu0 0
        %1116 = vmatpush1.bf16.msra.mxu0 0
        %1117 = vmatprep.subr.bf16.mxu0 0
        %1118 = vmatpush1.bf16.msra.mxu0 0
        %1119 = vmatprep.subr.bf16.mxu0 0
        %1120 = vmatpush1.bf16.msra.mxu0 0
        %1121 = vmatprep.subr.bf16.mxu0 0
        %1122 = vmatpush1.bf16.msra.mxu0 0
        %1123 = vmatprep.subr.bf16.mxu0 0
        %1124 = vmatpush1.bf16.msra.mxu0 0
        %1125 = vmatprep.subr.bf16.mxu0 %v912
        %1126 = vmatpush1.bf16.msra.mxu0 %v909
        %1127 = vmatprep.subr.bf16.mxu0 %v783
        %1128 = vmatpush1.bf16.msra.mxu0 %v782
        %1129 = vmatprep.subr.bf16.mxu0 0
        %1130 = vmatpush2.bf16.msra.mxu0 0
        %1131 = vmatprep.subr.bf16.mxu0 0
        %1132 = vmatpush2.bf16.msra.mxu0 0
        %1133 = vmatprep.subr.bf16.mxu0 0
        %1134 = vmatpush2.bf16.msra.mxu0 0
        %1135 = vmatprep.subr.bf16.mxu0 0
        %1136 = vmatpush2.bf16.msra.mxu0 0
        %1137 = vmatprep.subr.bf16.mxu0 0
        %1138 = vmatpush2.bf16.msra.mxu0 0
        %1139 = vmatprep.subr.bf16.mxu0 0
        %1140 = vmatpush2.bf16.msra.mxu0 0
        %1141 = vmatprep.subr.bf16.mxu0 0
        %1142 = vmatpush2.bf16.msra.mxu0 0
        %1143 = vmatprep.subr.bf16.mxu0 0
        %1144 = vmatpush2.bf16.msra.mxu0 0
        %1145 = vmatprep.mubr.bf16.mxu0 0
        %1146 = vmatmul.mubr.bf16.gmra.mxu0 %v860
        %v1147 = vpop.f32.mrf.mxu0
        %v1148 = vadd.f32 %v955, %v1147
        %v1149 = vpop.f32.mrf.mxu0
        %v1150 = vadd.f32 %v957, %v1149
        %v1151 = vpop.f32.mrf.mxu0
        %v1152 = vadd.f32 %v959, %v1151
        %v1153 = vpop.f32.mrf.mxu0
        %v1154 = vadd.f32 %v961, %v1153
        %1155 = vmatprep.mubr.bf16.mxu0 0
        %1156 = vmatmul.mubr.bf16.gmra.mxu0 %v863
        %v1157 = vpop.f32.mrf.mxu0
        %v1158 = vadd.f32 %v965, %v1157
        %v1159 = vpop.f32.mrf.mxu0
        %v1160 = vadd.f32 %v967, %v1159
        %v1161 = vpop.f32.mrf.mxu0
        %v1162 = vadd.f32 %v969, %v1161
        %v1163 = vpop.f32.mrf.mxu0
        %v1164 = vadd.f32 %v971, %v1163
        %1165 = vmatprep.mubr.bf16.mxu0 0
        %1166 = vmatmul.mubr.bf16.gmra.mxu0 %v866
        %v1167 = vpop.f32.mrf.mxu0
        %v1168 = vadd.f32 %v975, %v1167
        %v1169 = vpop.f32.mrf.mxu0
        %v1170 = vadd.f32 %v977, %v1169
        %v1171 = vpop.f32.mrf.mxu0
        %v1172 = vadd.f32 %v979, %v1171
        %v1173 = vpop.f32.mrf.mxu0
        %v1174 = vadd.f32 %v981, %v1173
        %1175 = vmatprep.mubr.bf16.mxu0 0
        %1176 = vmatmul.mubr.bf16.gmra.mxu0 %v869
        %v1177 = vpop.f32.mrf.mxu0
        %v1178 = vadd.f32 %v985, %v1177
        %v1179 = vpop.f32.mrf.mxu0
        %v1180 = vadd.f32 %v987, %v1179
        %v1181 = vpop.f32.mrf.mxu0
        %v1182 = vadd.f32 %v989, %v1181
        %v1183 = vpop.f32.mrf.mxu0
        %v1184 = vadd.f32 %v991, %v1183
        %1185 = vmatprep.mubr.bf16.mxu0 0
        %1186 = vmatmul.mubr.bf16.gmra.mxu0 %v872
        %v1187 = vpop.f32.mrf.mxu0
        %v1188 = vadd.f32 %v995, %v1187
        %v1189 = vpop.f32.mrf.mxu0
        %v1190 = vadd.f32 %v997, %v1189
        %v1191 = vpop.f32.mrf.mxu0
        %v1192 = vadd.f32 %v999, %v1191
        %v1193 = vpop.f32.mrf.mxu0
        %v1194 = vadd.f32 %v1001, %v1193
        %1195 = vmatprep.mubr.bf16.mxu0 0
        %1196 = vmatmul.mubr.bf16.gmra.mxu0 %v875
        %v1197 = vpop.f32.mrf.mxu0
        %v1198 = vadd.f32 %v1005, %v1197
        %v1199 = vpop.f32.mrf.mxu0
        %v1200 = vadd.f32 %v1007, %v1199
        %v1201 = vpop.f32.mrf.mxu0
        %v1202 = vadd.f32 %v1009, %v1201
        %v1203 = vpop.f32.mrf.mxu0
        %v1204 = vadd.f32 %v1011, %v1203
        %1205 = vmatprep.mubr.bf16.mxu0 0
        %1206 = vmatmul.mubr.bf16.gmra.mxu0 %v878
        %v1207 = vpop.f32.mrf.mxu0
        %v1208 = vadd.f32 %v1015, %v1207
        %v1209 = vpop.f32.mrf.mxu0
        %v1210 = vadd.f32 %v1017, %v1209
        %v1211 = vpop.f32.mrf.mxu0
        %v1212 = vadd.f32 %v1019, %v1211
        %v1213 = vpop.f32.mrf.mxu0
        %v1214 = vadd.f32 %v1021, %v1213
        %1215 = vmatprep.mubr.bf16.mxu0 0
        %1216 = vmatmul.mubr.bf16.gmra.mxu0 %v881
        %v1217 = vpop.f32.mrf.mxu0
        %v1218 = vadd.f32 %v1025, %v1217
        %v1219 = vpop.f32.mrf.mxu0
        %v1220 = vadd.f32 %v1027, %v1219
        %v1221 = vpop.f32.mrf.mxu0
        %v1222 = vadd.f32 %v1029, %v1221
        %v1223 = vpop.f32.mrf.mxu0
        %v1224 = vadd.f32 %v1031, %v1223
        %1225 = vmatprep.mubr.bf16.mxu0 0
        %1226 = vmatmul.mubr.bf16.gmra.mxu0 %v884
        %v1227 = vpop.f32.mrf.mxu0
        %v1228 = vadd.f32 %v1035, %v1227
        %v1229 = vpop.f32.mrf.mxu0
        %v1230 = vadd.f32 %v1037, %v1229
        %v1231 = vpop.f32.mrf.mxu0
        %v1232 = vadd.f32 %v1039, %v1231
        %v1233 = vpop.f32.mrf.mxu0
        %v1234 = vadd.f32 %v1041, %v1233
        %1235 = vmatprep.mubr.bf16.mxu0 0
        %1236 = vmatmul.mubr.bf16.gmra.mxu0 %v887
        %v1237 = vpop.f32.mrf.mxu0
        %v1238 = vadd.f32 %v1045, %v1237
        %v1239 = vpop.f32.mrf.mxu0
        %v1240 = vadd.f32 %v1047, %v1239
        %v1241 = vpop.f32.mrf.mxu0
        %v1242 = vadd.f32 %v1049, %v1241
        %v1243 = vpop.f32.mrf.mxu0
        %v1244 = vadd.f32 %v1051, %v1243
        %1245 = vmatprep.mubr.bf16.mxu0 0
        %1246 = vmatmul.mubr.bf16.gmra.mxu0 %v890
        %v1247 = vpop.f32.mrf.mxu0
        %v1248 = vadd.f32 %v1055, %v1247
        %v1249 = vpop.f32.mrf.mxu0
        %v1250 = vadd.f32 %v1057, %v1249
        %v1251 = vpop.f32.mrf.mxu0
        %v1252 = vadd.f32 %v1059, %v1251
        %v1253 = vpop.f32.mrf.mxu0
        %v1254 = vadd.f32 %v1061, %v1253
        %1255 = vmatprep.mubr.bf16.mxu0 0
        %1256 = vmatmul.mubr.bf16.gmra.mxu0 %v893
        %v1257 = vpop.f32.mrf.mxu0
        %v1258 = vadd.f32 %v1065, %v1257
        %v1259 = vpop.f32.mrf.mxu0
        %v1260 = vadd.f32 %v1067, %v1259
        %v1261 = vpop.f32.mrf.mxu0
        %v1262 = vadd.f32 %v1069, %v1261
        %v1263 = vpop.f32.mrf.mxu0
        %v1264 = vadd.f32 %v1071, %v1263
        %1265 = vmatprep.mubr.bf16.mxu0 0
        %1266 = vmatmul.mubr.bf16.gmra.mxu0 %v896
        %v1267 = vpop.f32.mrf.mxu0
        %v1268 = vadd.f32 %v1075, %v1267
        %v1269 = vpop.f32.mrf.mxu0
        %v1270 = vadd.f32 %v1077, %v1269
        %v1271 = vpop.f32.mrf.mxu0
        %v1272 = vadd.f32 %v1079, %v1271
        %v1273 = vpop.f32.mrf.mxu0
        %v1274 = vadd.f32 %v1081, %v1273
        %1275 = vmatprep.mubr.bf16.mxu0 0
        %1276 = vmatmul.mubr.bf16.gmra.mxu0 %v899
        %v1277 = vpop.f32.mrf.mxu0
        %v1278 = vadd.f32 %v1085, %v1277
        %v1279 = vpop.f32.mrf.mxu0
        %v1280 = vadd.f32 %v1087, %v1279
        %v1281 = vpop.f32.mrf.mxu0
        %v1282 = vadd.f32 %v1089, %v1281
        %v1283 = vpop.f32.mrf.mxu0
        %v1284 = vadd.f32 %v1091, %v1283
        %1285 = vmatprep.mubr.bf16.mxu0 0
        %1286 = vmatmul.mubr.bf16.gmra.mxu0 %v902
        %v1287 = vpop.f32.mrf.mxu0
        %v1288 = vadd.f32 %v1095, %v1287
        %v1289 = vpop.f32.mrf.mxu0
        %v1290 = vadd.f32 %v1097, %v1289
        %v1291 = vpop.f32.mrf.mxu0
        %v1292 = vadd.f32 %v1099, %v1291
        %v1293 = vpop.f32.mrf.mxu0
        %v1294 = vadd.f32 %v1101, %v1293
        %1295 = vmatprep.mubr.bf16.mxu0 0
        %1296 = vmatmul.mubr.bf16.gmra.mxu0 %v905
        %v1297 = vpop.f32.mrf.mxu0
        %v1298 = vadd.f32 %v1105, %v1297
        %v1299 = vpop.f32.mrf.mxu0
        %v1300 = vadd.f32 %v1107, %v1299
        %v1301 = vpop.f32.mrf.mxu0
        %v1302 = vadd.f32 %v1109, %v1301
        %v1303 = vpop.f32.mrf.mxu0
        %v1304 = vadd.f32 %v1111, %v1303
        %1305 = vdwg.mxu0
        %1306 = vmatprep.subr.bf16.mxu0 %v749
        %1307 = vmatpush1.bf16.msra.mxu0 %v748
        %1308 = vmatprep.subr.bf16.mxu0 %v745
        %1309 = vmatpush1.bf16.msra.mxu0 %v744
        %1310 = vmatprep.subr.bf16.mxu0 %v741
        %1311 = vmatpush1.bf16.msra.mxu0 %v740
        %1312 = vmatprep.subr.bf16.mxu0 %v737
        %1313 = vmatpush1.bf16.msra.mxu0 %v736
        %1314 = vmatprep.subr.bf16.mxu0 %v733
        %1315 = vmatpush1.bf16.msra.mxu0 %v732
        %1316 = vmatprep.subr.bf16.mxu0 %v729
        %1317 = vmatpush1.bf16.msra.mxu0 %v728
        %1318 = vmatprep.subr.bf16.mxu0 %v725
        %1319 = vmatpush1.bf16.msra.mxu0 %v724
        %1320 = vmatprep.subr.bf16.mxu0 %v721
        %1321 = vmatpush1.bf16.msra.mxu0 %v720
        %1322 = vmatprep.subr.bf16.mxu0 %v781
        %1323 = vmatpush2.bf16.msra.mxu0 %v780
        %1324 = vmatprep.subr.bf16.mxu0 %v777
        %1325 = vmatpush2.bf16.msra.mxu0 %v776
        %1326 = vmatprep.subr.bf16.mxu0 %v773
        %1327 = vmatpush2.bf16.msra.mxu0 %v772
        %1328 = vmatprep.subr.bf16.mxu0 %v769
        %1329 = vmatpush2.bf16.msra.mxu0 %v768
        %1330 = vmatprep.subr.bf16.mxu0 %v765
        %1331 = vmatpush2.bf16.msra.mxu0 %v764
        %1332 = vmatprep.subr.bf16.mxu0 %v761
        %1333 = vmatpush2.bf16.msra.mxu0 %v760
        %1334 = vmatprep.subr.bf16.mxu0 %v757
        %1335 = vmatpush2.bf16.msra.mxu0 %v756
        %1336 = vmatprep.subr.bf16.mxu0 %v753
        %1337 = vmatpush2.bf16.msra.mxu0 %v752
        %1338 = vmatprep.mubr.bf16.mxu0 %v383
        %1339 = vmatmul.mubr.bf16.gmra.mxu0 %v382
        %v1340 = vpop.f32.mrf.mxu0
        %v1341 = vadd.f32 0.0, %v1340
        %v1342 = vpop.f32.mrf.mxu0
        %v1343 = vadd.f32 0.0, %v1342
        %v1344 = vpop.f32.mrf.mxu0
        %v1345 = vadd.f32 0.0, %v1344
        %v1346 = vpop.f32.mrf.mxu0
        %v1347 = vadd.f32 0.0, %v1346
        %1348 = vmatprep.mubr.bf16.mxu0 %v386
        %1349 = vmatmul.mubr.bf16.gmra.mxu0 %v385
        %v1350 = vpop.f32.mrf.mxu0
        %v1351 = vadd.f32 0.0, %v1350
        %v1352 = vpop.f32.mrf.mxu0
        %v1353 = vadd.f32 0.0, %v1352
        %v1354 = vpop.f32.mrf.mxu0
        %v1355 = vadd.f32 0.0, %v1354
        %v1356 = vpop.f32.mrf.mxu0
        %v1357 = vadd.f32 0.0, %v1356
        %1358 = vmatprep.mubr.bf16.mxu0 %v389
        %1359 = vmatmul.mubr.bf16.gmra.mxu0 %v388
        %v1360 = vpop.f32.mrf.mxu0
        %v1361 = vadd.f32 0.0, %v1360
        %v1362 = vpop.f32.mrf.mxu0
        %v1363 = vadd.f32 0.0, %v1362
        %v1364 = vpop.f32.mrf.mxu0
        %v1365 = vadd.f32 0.0, %v1364
        %v1366 = vpop.f32.mrf.mxu0
        %v1367 = vadd.f32 0.0, %v1366
        %1368 = vmatprep.mubr.bf16.mxu0 %v392
        %1369 = vmatmul.mubr.bf16.gmra.mxu0 %v391
        %v1370 = vpop.f32.mrf.mxu0
        %v1371 = vadd.f32 0.0, %v1370
        %v1372 = vpop.f32.mrf.mxu0
        %v1373 = vadd.f32 0.0, %v1372
        %v1374 = vpop.f32.mrf.mxu0
        %v1375 = vadd.f32 0.0, %v1374
        %v1376 = vpop.f32.mrf.mxu0
        %v1377 = vadd.f32 0.0, %v1376
        %1378 = vmatprep.mubr.bf16.mxu0 %v395
        %1379 = vmatmul.mubr.bf16.gmra.mxu0 %v394
        %v1380 = vpop.f32.mrf.mxu0
        %v1381 = vadd.f32 0.0, %v1380
        %v1382 = vpop.f32.mrf.mxu0
        %v1383 = vadd.f32 0.0, %v1382
        %v1384 = vpop.f32.mrf.mxu0
        %v1385 = vadd.f32 0.0, %v1384
        %v1386 = vpop.f32.mrf.mxu0
        %v1387 = vadd.f32 0.0, %v1386
        %1388 = vmatprep.mubr.bf16.mxu0 %v398
        %1389 = vmatmul.mubr.bf16.gmra.mxu0 %v397
        %v1390 = vpop.f32.mrf.mxu0
        %v1391 = vadd.f32 0.0, %v1390
        %v1392 = vpop.f32.mrf.mxu0
        %v1393 = vadd.f32 0.0, %v1392
        %v1394 = vpop.f32.mrf.mxu0
        %v1395 = vadd.f32 0.0, %v1394
        %v1396 = vpop.f32.mrf.mxu0
        %v1397 = vadd.f32 0.0, %v1396
        %1398 = vmatprep.mubr.bf16.mxu0 %v401
        %1399 = vmatmul.mubr.bf16.gmra.mxu0 %v400
        %v1400 = vpop.f32.mrf.mxu0
        %v1401 = vadd.f32 0.0, %v1400
        %v1402 = vpop.f32.mrf.mxu0
        %v1403 = vadd.f32 0.0, %v1402
        %v1404 = vpop.f32.mrf.mxu0
        %v1405 = vadd.f32 0.0, %v1404
        %v1406 = vpop.f32.mrf.mxu0
        %v1407 = vadd.f32 0.0, %v1406
        %1408 = vmatprep.mubr.bf16.mxu0 %v404
        %1409 = vmatmul.mubr.bf16.gmra.mxu0 %v403
        %v1410 = vpop.f32.mrf.mxu0
        %v1411 = vadd.f32 0.0, %v1410
        %v1412 = vpop.f32.mrf.mxu0
        %v1413 = vadd.f32 0.0, %v1412
        %v1414 = vpop.f32.mrf.mxu0
        %v1415 = vadd.f32 0.0, %v1414
        %v1416 = vpop.f32.mrf.mxu0
        %v1417 = vadd.f32 0.0, %v1416
        %1418 = vmatprep.mubr.bf16.mxu0 %v407
        %1419 = vmatmul.mubr.bf16.gmra.mxu0 %v406
        %v1420 = vpop.f32.mrf.mxu0
        %v1421 = vadd.f32 0.0, %v1420
        %v1422 = vpop.f32.mrf.mxu0
        %v1423 = vadd.f32 0.0, %v1422
        %v1424 = vpop.f32.mrf.mxu0
        %v1425 = vadd.f32 0.0, %v1424
        %v1426 = vpop.f32.mrf.mxu0
        %v1427 = vadd.f32 0.0, %v1426
        %1428 = vmatprep.mubr.bf16.mxu0 %v410
        %1429 = vmatmul.mubr.bf16.gmra.mxu0 %v409
        %v1430 = vpop.f32.mrf.mxu0
        %v1431 = vadd.f32 0.0, %v1430
        %v1432 = vpop.f32.mrf.mxu0
        %v1433 = vadd.f32 0.0, %v1432
        %v1434 = vpop.f32.mrf.mxu0
        %v1435 = vadd.f32 0.0, %v1434
        %v1436 = vpop.f32.mrf.mxu0
        %v1437 = vadd.f32 0.0, %v1436
        %1438 = vmatprep.mubr.bf16.mxu0 %v413
        %1439 = vmatmul.mubr.bf16.gmra.mxu0 %v412
        %v1440 = vpop.f32.mrf.mxu0
        %v1441 = vadd.f32 0.0, %v1440
        %v1442 = vpop.f32.mrf.mxu0
        %v1443 = vadd.f32 0.0, %v1442
        %v1444 = vpop.f32.mrf.mxu0
        %v1445 = vadd.f32 0.0, %v1444
        %v1446 = vpop.f32.mrf.mxu0
        %v1447 = vadd.f32 0.0, %v1446
        %1448 = vmatprep.mubr.bf16.mxu0 %v416
        %1449 = vmatmul.mubr.bf16.gmra.mxu0 %v415
        %v1450 = vpop.f32.mrf.mxu0
        %v1451 = vadd.f32 0.0, %v1450
        %v1452 = vpop.f32.mrf.mxu0
        %v1453 = vadd.f32 0.0, %v1452
        %v1454 = vpop.f32.mrf.mxu0
        %v1455 = vadd.f32 0.0, %v1454
        %v1456 = vpop.f32.mrf.mxu0
        %v1457 = vadd.f32 0.0, %v1456
        %1458 = vmatprep.mubr.bf16.mxu0 %v419
        %1459 = vmatmul.mubr.bf16.gmra.mxu0 %v418
        %v1460 = vpop.f32.mrf.mxu0
        %v1461 = vadd.f32 0.0, %v1460
        %v1462 = vpop.f32.mrf.mxu0
        %v1463 = vadd.f32 0.0, %v1462
        %v1464 = vpop.f32.mrf.mxu0
        %v1465 = vadd.f32 0.0, %v1464
        %v1466 = vpop.f32.mrf.mxu0
        %v1467 = vadd.f32 0.0, %v1466
        %1468 = vmatprep.mubr.bf16.mxu0 %v422
        %1469 = vmatmul.mubr.bf16.gmra.mxu0 %v421
        %v1470 = vpop.f32.mrf.mxu0
        %v1471 = vadd.f32 0.0, %v1470
        %v1472 = vpop.f32.mrf.mxu0
        %v1473 = vadd.f32 0.0, %v1472
        %v1474 = vpop.f32.mrf.mxu0
        %v1475 = vadd.f32 0.0, %v1474
        %v1476 = vpop.f32.mrf.mxu0
        %v1477 = vadd.f32 0.0, %v1476
        %1478 = vmatprep.mubr.bf16.mxu0 %v425
        %1479 = vmatmul.mubr.bf16.gmra.mxu0 %v424
        %v1480 = vpop.f32.mrf.mxu0
        %v1481 = vadd.f32 0.0, %v1480
        %v1482 = vpop.f32.mrf.mxu0
        %v1483 = vadd.f32 0.0, %v1482
        %v1484 = vpop.f32.mrf.mxu0
        %v1485 = vadd.f32 0.0, %v1484
        %v1486 = vpop.f32.mrf.mxu0
        %v1487 = vadd.f32 0.0, %v1486
        %1488 = vmatprep.mubr.bf16.mxu0 %v428
        %1489 = vmatmul.mubr.bf16.gmra.mxu0 %v427
        %v1490 = vpop.f32.mrf.mxu0
        %v1491 = vadd.f32 0.0, %v1490
        %v1492 = vpop.f32.mrf.mxu0
        %v1493 = vadd.f32 0.0, %v1492
        %v1494 = vpop.f32.mrf.mxu0
        %v1495 = vadd.f32 0.0, %v1494
        %v1496 = vpop.f32.mrf.mxu0
        %v1497 = vadd.f32 0.0, %v1496
        %1498 = vdwg.mxu0
        %1499 = vmatprep.subr.bf16.mxu0 0
        %1500 = vmatpush1.bf16.msra.mxu0 0
        %1501 = vmatprep.subr.bf16.mxu0 0
        %1502 = vmatpush1.bf16.msra.mxu0 0
        %1503 = vmatprep.subr.bf16.mxu0 0
        %1504 = vmatpush1.bf16.msra.mxu0 0
        %1505 = vmatprep.subr.bf16.mxu0 0
        %1506 = vmatpush1.bf16.msra.mxu0 0
        %1507 = vmatprep.subr.bf16.mxu0 0
        %1508 = vmatpush1.bf16.msra.mxu0 0
        %1509 = vmatprep.subr.bf16.mxu0 0
        %1510 = vmatpush1.bf16.msra.mxu0 0
        %1511 = vmatprep.subr.bf16.mxu0 %v918
        %1512 = vmatpush1.bf16.msra.mxu0 %v915
        %1513 = vmatprep.subr.bf16.mxu0 %v785
        %1514 = vmatpush1.bf16.msra.mxu0 %v784
        %1515 = vmatprep.subr.bf16.mxu0 0
        %1516 = vmatpush2.bf16.msra.mxu0 0
        %1517 = vmatprep.subr.bf16.mxu0 0
        %1518 = vmatpush2.bf16.msra.mxu0 0
        %1519 = vmatprep.subr.bf16.mxu0 0
        %1520 = vmatpush2.bf16.msra.mxu0 0
        %1521 = vmatprep.subr.bf16.mxu0 0
        %1522 = vmatpush2.bf16.msra.mxu0 0
        %1523 = vmatprep.subr.bf16.mxu0 0
        %1524 = vmatpush2.bf16.msra.mxu0 0
        %1525 = vmatprep.subr.bf16.mxu0 0
        %1526 = vmatpush2.bf16.msra.mxu0 0
        %1527 = vmatprep.subr.bf16.mxu0 0
        %1528 = vmatpush2.bf16.msra.mxu0 0
        %1529 = vmatprep.subr.bf16.mxu0 0
        %1530 = vmatpush2.bf16.msra.mxu0 0
        %1531 = vmatprep.mubr.bf16.mxu0 0
        %1532 = vmatmul.mubr.bf16.gmra.mxu0 %v860
        %v1533 = vpop.f32.mrf.mxu0
        %v1534 = vadd.f32 %v1341, %v1533
        %v1535 = vpop.f32.mrf.mxu0
        %v1536 = vadd.f32 %v1343, %v1535
        %v1537 = vpop.f32.mrf.mxu0
        %v1538 = vadd.f32 %v1345, %v1537
        %v1539 = vpop.f32.mrf.mxu0
        %v1540 = vadd.f32 %v1347, %v1539
        %1541 = vmatprep.mubr.bf16.mxu0 0
        %1542 = vmatmul.mubr.bf16.gmra.mxu0 %v863
        %v1543 = vpop.f32.mrf.mxu0
        %v1544 = vadd.f32 %v1351, %v1543
        %v1545 = vpop.f32.mrf.mxu0
        %v1546 = vadd.f32 %v1353, %v1545
        %v1547 = vpop.f32.mrf.mxu0
        %v1548 = vadd.f32 %v1355, %v1547
        %v1549 = vpop.f32.mrf.mxu0
        %v1550 = vadd.f32 %v1357, %v1549
        %1551 = vmatprep.mubr.bf16.mxu0 0
        %1552 = vmatmul.mubr.bf16.gmra.mxu0 %v866
        %v1553 = vpop.f32.mrf.mxu0
        %v1554 = vadd.f32 %v1361, %v1553
        %v1555 = vpop.f32.mrf.mxu0
        %v1556 = vadd.f32 %v1363, %v1555
        %v1557 = vpop.f32.mrf.mxu0
        %v1558 = vadd.f32 %v1365, %v1557
        %v1559 = vpop.f32.mrf.mxu0
        %v1560 = vadd.f32 %v1367, %v1559
        %1561 = vmatprep.mubr.bf16.mxu0 0
        %1562 = vmatmul.mubr.bf16.gmra.mxu0 %v869
        %v1563 = vpop.f32.mrf.mxu0
        %v1564 = vadd.f32 %v1371, %v1563
        %v1565 = vpop.f32.mrf.mxu0
        %v1566 = vadd.f32 %v1373, %v1565
        %v1567 = vpop.f32.mrf.mxu0
        %v1568 = vadd.f32 %v1375, %v1567
        %v1569 = vpop.f32.mrf.mxu0
        %v1570 = vadd.f32 %v1377, %v1569
        %1571 = vmatprep.mubr.bf16.mxu0 0
        %1572 = vmatmul.mubr.bf16.gmra.mxu0 %v872
        %v1573 = vpop.f32.mrf.mxu0
        %v1574 = vadd.f32 %v1381, %v1573
        %v1575 = vpop.f32.mrf.mxu0
        %v1576 = vadd.f32 %v1383, %v1575
        %v1577 = vpop.f32.mrf.mxu0
        %v1578 = vadd.f32 %v1385, %v1577
        %v1579 = vpop.f32.mrf.mxu0
        %v1580 = vadd.f32 %v1387, %v1579
        %1581 = vmatprep.mubr.bf16.mxu0 0
        %1582 = vmatmul.mubr.bf16.gmra.mxu0 %v875
        %v1583 = vpop.f32.mrf.mxu0
        %v1584 = vadd.f32 %v1391, %v1583
        %v1585 = vpop.f32.mrf.mxu0
        %v1586 = vadd.f32 %v1393, %v1585
        %v1587 = vpop.f32.mrf.mxu0
        %v1588 = vadd.f32 %v1395, %v1587
        %v1589 = vpop.f32.mrf.mxu0
        %v1590 = vadd.f32 %v1397, %v1589
        %1591 = vmatprep.mubr.bf16.mxu0 0
        %1592 = vmatmul.mubr.bf16.gmra.mxu0 %v878
        %v1593 = vpop.f32.mrf.mxu0
        %v1594 = vadd.f32 %v1401, %v1593
        %v1595 = vpop.f32.mrf.mxu0
        %v1596 = vadd.f32 %v1403, %v1595
        %v1597 = vpop.f32.mrf.mxu0
        %v1598 = vadd.f32 %v1405, %v1597
        %v1599 = vpop.f32.mrf.mxu0
        %v1600 = vadd.f32 %v1407, %v1599
        %1601 = vmatprep.mubr.bf16.mxu0 0
        %1602 = vmatmul.mubr.bf16.gmra.mxu0 %v881
        %v1603 = vpop.f32.mrf.mxu0
        %v1604 = vadd.f32 %v1411, %v1603
        %v1605 = vpop.f32.mrf.mxu0
        %v1606 = vadd.f32 %v1413, %v1605
        %v1607 = vpop.f32.mrf.mxu0
        %v1608 = vadd.f32 %v1415, %v1607
        %v1609 = vpop.f32.mrf.mxu0
        %v1610 = vadd.f32 %v1417, %v1609
        %1611 = vmatprep.mubr.bf16.mxu0 0
        %1612 = vmatmul.mubr.bf16.gmra.mxu0 %v884
        %v1613 = vpop.f32.mrf.mxu0
        %v1614 = vadd.f32 %v1421, %v1613
        %v1615 = vpop.f32.mrf.mxu0
        %v1616 = vadd.f32 %v1423, %v1615
        %v1617 = vpop.f32.mrf.mxu0
        %v1618 = vadd.f32 %v1425, %v1617
        %v1619 = vpop.f32.mrf.mxu0
        %v1620 = vadd.f32 %v1427, %v1619
        %1621 = vmatprep.mubr.bf16.mxu0 0
        %1622 = vmatmul.mubr.bf16.gmra.mxu0 %v887
        %v1623 = vpop.f32.mrf.mxu0
        %v1624 = vadd.f32 %v1431, %v1623
        %v1625 = vpop.f32.mrf.mxu0
        %v1626 = vadd.f32 %v1433, %v1625
        %v1627 = vpop.f32.mrf.mxu0
        %v1628 = vadd.f32 %v1435, %v1627
        %v1629 = vpop.f32.mrf.mxu0
        %v1630 = vadd.f32 %v1437, %v1629
        %1631 = vmatprep.mubr.bf16.mxu0 0
        %1632 = vmatmul.mubr.bf16.gmra.mxu0 %v890
        %v1633 = vpop.f32.mrf.mxu0
        %v1634 = vadd.f32 %v1441, %v1633
        %v1635 = vpop.f32.mrf.mxu0
        %v1636 = vadd.f32 %v1443, %v1635
        %v1637 = vpop.f32.mrf.mxu0
        %v1638 = vadd.f32 %v1445, %v1637
        %v1639 = vpop.f32.mrf.mxu0
        %v1640 = vadd.f32 %v1447, %v1639
        %1641 = vmatprep.mubr.bf16.mxu0 0
        %1642 = vmatmul.mubr.bf16.gmra.mxu0 %v893
        %v1643 = vpop.f32.mrf.mxu0
        %v1644 = vadd.f32 %v1451, %v1643
        %v1645 = vpop.f32.mrf.mxu0
        %v1646 = vadd.f32 %v1453, %v1645
        %v1647 = vpop.f32.mrf.mxu0
        %v1648 = vadd.f32 %v1455, %v1647
        %v1649 = vpop.f32.mrf.mxu0
        %v1650 = vadd.f32 %v1457, %v1649
        %1651 = vmatprep.mubr.bf16.mxu0 0
        %1652 = vmatmul.mubr.bf16.gmra.mxu0 %v896
        %v1653 = vpop.f32.mrf.mxu0
        %v1654 = vadd.f32 %v1461, %v1653
        %v1655 = vpop.f32.mrf.mxu0
        %v1656 = vadd.f32 %v1463, %v1655
        %v1657 = vpop.f32.mrf.mxu0
        %v1658 = vadd.f32 %v1465, %v1657
        %v1659 = vpop.f32.mrf.mxu0
        %v1660 = vadd.f32 %v1467, %v1659
        %1661 = vmatprep.mubr.bf16.mxu0 0
        %1662 = vmatmul.mubr.bf16.gmra.mxu0 %v899
        %v1663 = vpop.f32.mrf.mxu0
        %v1664 = vadd.f32 %v1471, %v1663
        %v1665 = vpop.f32.mrf.mxu0
        %v1666 = vadd.f32 %v1473, %v1665
        %v1667 = vpop.f32.mrf.mxu0
        %v1668 = vadd.f32 %v1475, %v1667
        %v1669 = vpop.f32.mrf.mxu0
        %v1670 = vadd.f32 %v1477, %v1669
        %1671 = vmatprep.mubr.bf16.mxu0 0
        %1672 = vmatmul.mubr.bf16.gmra.mxu0 %v902
        %v1673 = vpop.f32.mrf.mxu0
        %v1674 = vadd.f32 %v1481, %v1673
        %v1675 = vpop.f32.mrf.mxu0
        %v1676 = vadd.f32 %v1483, %v1675
        %v1677 = vpop.f32.mrf.mxu0
        %v1678 = vadd.f32 %v1485, %v1677
        %v1679 = vpop.f32.mrf.mxu0
        %v1680 = vadd.f32 %v1487, %v1679
        %1681 = vmatprep.mubr.bf16.mxu0 0
        %1682 = vmatmul.mubr.bf16.gmra.mxu0 %v905
        %v1683 = vpop.f32.mrf.mxu0
        %v1684 = vadd.f32 %v1491, %v1683
        %v1685 = vpop.f32.mrf.mxu0
        %v1686 = vadd.f32 %v1493, %v1685
        %v1687 = vpop.f32.mrf.mxu0
        %v1688 = vadd.f32 %v1495, %v1687
        %v1689 = vpop.f32.mrf.mxu0
        %v1690 = vadd.f32 %v1497, %v1689
        %1691 = vdwg.mxu0
        %v1692 = vpack.c.bf16 %v1152, %v1148
        %v1693 = vpack.c.bf16 %v1154, %v1150
        %v1694 = vpack.c.bf16 %v1538, %v1534
        %v1695 = vpack.c.bf16 %v1540, %v1536
        %v1696 = vpack.c.bf16 %v1162, %v1158
        %v1697 = vpack.c.bf16 %v1164, %v1160
        %v1698 = vpack.c.bf16 %v1548, %v1544
        %v1699 = vpack.c.bf16 %v1550, %v1546
        %v1700 = vpack.c.bf16 %v1172, %v1168
        %v1701 = vpack.c.bf16 %v1174, %v1170
        %v1702 = vpack.c.bf16 %v1558, %v1554
        %v1703 = vpack.c.bf16 %v1560, %v1556
        %v1704 = vpack.c.bf16 %v1182, %v1178
        %v1705 = vpack.c.bf16 %v1184, %v1180
        %v1706 = vpack.c.bf16 %v1568, %v1564
        %v1707 = vpack.c.bf16 %v1570, %v1566
        %v1708 = vpack.c.bf16 %v1192, %v1188
        %v1709 = vpack.c.bf16 %v1194, %v1190
        %v1710 = vpack.c.bf16 %v1578, %v1574
        %v1711 = vpack.c.bf16 %v1580, %v1576
        %v1712 = vpack.c.bf16 %v1202, %v1198
        %v1713 = vpack.c.bf16 %v1204, %v1200
        %v1714 = vpack.c.bf16 %v1588, %v1584
        %v1715 = vpack.c.bf16 %v1590, %v1586
        %v1716 = vpack.c.bf16 %v1212, %v1208
        %v1717 = vpack.c.bf16 %v1214, %v1210
        %v1718 = vpack.c.bf16 %v1598, %v1594
        %v1719 = vpack.c.bf16 %v1600, %v1596
        %v1720 = vpack.c.bf16 %v1222, %v1218
        %v1721 = vpack.c.bf16 %v1224, %v1220
        %v1722 = vpack.c.bf16 %v1608, %v1604
        %v1723 = vpack.c.bf16 %v1610, %v1606
        %v1724 = vpack.c.bf16 %v1232, %v1228
        %v1725 = vpack.c.bf16 %v1234, %v1230
        %v1726 = vpack.c.bf16 %v1618, %v1614
        %v1727 = vpack.c.bf16 %v1620, %v1616
        %v1728 = vpack.c.bf16 %v1242, %v1238
        %v1729 = vpack.c.bf16 %v1244, %v1240
        %v1730 = vpack.c.bf16 %v1628, %v1624
        %v1731 = vpack.c.bf16 %v1630, %v1626
        %v1732 = vpack.c.bf16 %v1252, %v1248
        %v1733 = vpack.c.bf16 %v1254, %v1250
        %v1734 = vpack.c.bf16 %v1638, %v1634
        %v1735 = vpack.c.bf16 %v1640, %v1636
        %v1736 = vpack.c.bf16 %v1262, %v1258
        %v1737 = vpack.c.bf16 %v1264, %v1260
        %v1738 = vpack.c.bf16 %v1648, %v1644
        %v1739 = vpack.c.bf16 %v1650, %v1646
        %v1740 = vpack.c.bf16 %v1272, %v1268
        %v1741 = vpack.c.bf16 %v1274, %v1270
        %v1742 = vpack.c.bf16 %v1658, %v1654
        %v1743 = vpack.c.bf16 %v1660, %v1656
        %v1744 = vpack.c.bf16 %v1282, %v1278
        %v1745 = vpack.c.bf16 %v1284, %v1280
        %v1746 = vpack.c.bf16 %v1668, %v1664
        %v1747 = vpack.c.bf16 %v1670, %v1666
        %v1748 = vpack.c.bf16 %v1292, %v1288
        %v1749 = vpack.c.bf16 %v1294, %v1290
        %v1750 = vpack.c.bf16 %v1678, %v1674
        %v1751 = vpack.c.bf16 %v1680, %v1676
        %v1752 = vpack.c.bf16 %v1302, %v1298
        %v1753 = vpack.c.bf16 %v1304, %v1300
        %v1754 = vpack.c.bf16 %v1688, %v1684
        %v1755 = vpack.c.bf16 %v1690, %v1686
        %v1756 = vld [vmem:[%s2] sm:$0xf]
        %v1759 = vunpack.c.l.s4 1966171168
        %v1760 = vunpack.c.0.s8 %v1759
        %v1761 = vlaneseq
        %v1762 = vshrl.u32 %v1761, 7
        %v1763 = vsub.s32 %v1760, %v1762
        %v1764 = vrot.slane %v1756, %v1763
        %v1765 = vcombine.high %v1764, %v1764
        %v1767 = vunpack.c.l.s4 1966171168
        %v1768 = vunpack.c.0.s8 %v1767
        %v1769 = vlaneseq
        %v1770 = vshrl.u32 %v1769, 7
        %v1771 = vsub.s32 %v1768, %v1770
        %v1772 = vrot.slane %v1764, %v1771
        %v1774 = vunpack.c.l.s4 1966171168
        %v1775 = vunpack.c.0.s8 %v1774
        %v1776 = vlaneseq
        %v1777 = vshrl.u32 %v1776, 7
        %v1778 = vsub.s32 %v1775, %v1777
        %v1779 = vrot.slane %v1765, %v1778
        %v1780 = vcombine.high %v1772, %v1772
        %v1781 = vcombine.high %v1779, %v1779
        %v1783 = vpack.i.b16 %v1772, %v1772
        %v1785 = vlaneseq
        %v1786 = vshrl.u32 %v1785, 7
        %v1787 = vsub.s32 0, %v1786
        %v1788 = vrot.slane %v1783, %v1787
        %v1790 = vpack.i.b16 %v1779, %v1779
        %v1792 = vlaneseq
        %v1793 = vshrl.u32 %v1792, 7
        %v1794 = vsub.s32 0, %v1793
        %v1795 = vrot.slane %v1790, %v1794
        %v1797 = vpack.i.b16 %v1780, %v1780
        %v1799 = vlaneseq
        %v1800 = vshrl.u32 %v1799, 7
        %v1801 = vsub.s32 0, %v1800
        %v1802 = vrot.slane %v1797, %v1801
        %v1804 = vpack.i.b16 %v1781, %v1781
        %v1806 = vlaneseq
        %v1807 = vshrl.u32 %v1806, 7
        %v1808 = vsub.s32 0, %v1807
        %v1809 = vrot.slane %v1804, %v1808
        %v1810 = vadd.bf16 %v1692, %v1788
        %v1811 = vadd.bf16 %v1693, %v1795
        %v1812 = vadd.bf16 %v1694, %v1802
        %v1813 = vadd.bf16 %v1695, %v1809
        %v1814 = vadd.bf16 %v1696, %v1788
        %v1815 = vadd.bf16 %v1697, %v1795
        %v1816 = vadd.bf16 %v1698, %v1802
        %v1817 = vadd.bf16 %v1699, %v1809
        %v1818 = vadd.bf16 %v1700, %v1788
        %v1819 = vadd.bf16 %v1701, %v1795
        %v1820 = vadd.bf16 %v1702, %v1802
        %v1821 = vadd.bf16 %v1703, %v1809
        %v1822 = vadd.bf16 %v1704, %v1788
        %v1823 = vadd.bf16 %v1705, %v1795
        %v1824 = vadd.bf16 %v1706, %v1802
        %v1825 = vadd.bf16 %v1707, %v1809
        %v1826 = vadd.bf16 %v1708, %v1788
        %v1827 = vadd.bf16 %v1709, %v1795
        %v1828 = vadd.bf16 %v1710, %v1802
        %v1829 = vadd.bf16 %v1711, %v1809
        %v1830 = vadd.bf16 %v1712, %v1788
        %v1831 = vadd.bf16 %v1713, %v1795
        %v1832 = vadd.bf16 %v1714, %v1802
        %v1833 = vadd.bf16 %v1715, %v1809
        %v1834 = vadd.bf16 %v1716, %v1788
        %v1835 = vadd.bf16 %v1717, %v1795
        %v1836 = vadd.bf16 %v1718, %v1802
        %v1837 = vadd.bf16 %v1719, %v1809
        %v1838 = vadd.bf16 %v1720, %v1788
        %v1839 = vadd.bf16 %v1721, %v1795
        %v1840 = vadd.bf16 %v1722, %v1802
        %v1841 = vadd.bf16 %v1723, %v1809
        %v1842 = vadd.bf16 %v1724, %v1788
        %v1843 = vadd.bf16 %v1725, %v1795
        %v1844 = vadd.bf16 %v1726, %v1802
        %v1845 = vadd.bf16 %v1727, %v1809
        %v1846 = vadd.bf16 %v1728, %v1788
        %v1847 = vadd.bf16 %v1729, %v1795
        %v1848 = vadd.bf16 %v1730, %v1802
        %v1849 = vadd.bf16 %v1731, %v1809
        %v1850 = vadd.bf16 %v1732, %v1788
        %v1851 = vadd.bf16 %v1733, %v1795
        %v1852 = vadd.bf16 %v1734, %v1802
        %v1853 = vadd.bf16 %v1735, %v1809
        %v1854 = vadd.bf16 %v1736, %v1788
        %v1855 = vadd.bf16 %v1737, %v1795
        %v1856 = vadd.bf16 %v1738, %v1802
        %v1857 = vadd.bf16 %v1739, %v1809
        %v1858 = vadd.bf16 %v1740, %v1788
        %v1859 = vadd.bf16 %v1741, %v1795
        %v1860 = vadd.bf16 %v1742, %v1802
        %v1861 = vadd.bf16 %v1743, %v1809
        %v1862 = vadd.bf16 %v1744, %v1788
        %v1863 = vadd.bf16 %v1745, %v1795
        %v1864 = vadd.bf16 %v1746, %v1802
        %v1865 = vadd.bf16 %v1747, %v1809
        %v1866 = vadd.bf16 %v1748, %v1788
        %v1867 = vadd.bf16 %v1749, %v1795
        %v1868 = vadd.bf16 %v1750, %v1802
        %v1869 = vadd.bf16 %v1751, %v1809
        %v1870 = vadd.bf16 %v1752, %v1788
        %v1871 = vadd.bf16 %v1753, %v1795
        %v1872 = vadd.bf16 %v1754, %v1802
        %v1873 = vadd.bf16 %v1755, %v1809
        %v1874 = vmul.bf16 %v1810, 1045249613
        %v1875 = vmul.bf16 %v1811, 1045249613
        %v1876 = vmul.bf16 %v1812, 1045249613
        %v1877 = vmul.bf16 %v1813, 1045249613
        %v1878 = vmul.bf16 %v1814, 1045249613
        %v1879 = vmul.bf16 %v1815, 1045249613
        %v1880 = vmul.bf16 %v1816, 1045249613
        %v1881 = vmul.bf16 %v1817, 1045249613
        %v1882 = vmul.bf16 %v1818, 1045249613
        %v1883 = vmul.bf16 %v1819, 1045249613
        %v1884 = vmul.bf16 %v1820, 1045249613
        %v1885 = vmul.bf16 %v1821, 1045249613
        %v1886 = vmul.bf16 %v1822, 1045249613
        %v1887 = vmul.bf16 %v1823, 1045249613
        %v1888 = vmul.bf16 %v1824, 1045249613
        %v1889 = vmul.bf16 %v1825, 1045249613
        %v1890 = vmul.bf16 %v1826, 1045249613
        %v1891 = vmul.bf16 %v1827, 1045249613
        %v1892 = vmul.bf16 %v1828, 1045249613
        %v1893 = vmul.bf16 %v1829, 1045249613
        %v1894 = vmul.bf16 %v1830, 1045249613
        %v1895 = vmul.bf16 %v1831, 1045249613
        %v1896 = vmul.bf16 %v1832, 1045249613
        %v1897 = vmul.bf16 %v1833, 1045249613
        %v1898 = vmul.bf16 %v1834, 1045249613
        %v1899 = vmul.bf16 %v1835, 1045249613
        %v1900 = vmul.bf16 %v1836, 1045249613
        %v1901 = vmul.bf16 %v1837, 1045249613
        %v1902 = vmul.bf16 %v1838, 1045249613
        %v1903 = vmul.bf16 %v1839, 1045249613
        %v1904 = vmul.bf16 %v1840, 1045249613
        %v1905 = vmul.bf16 %v1841, 1045249613
        %v1906 = vmul.bf16 %v1842, 1045249613
        %v1907 = vmul.bf16 %v1843, 1045249613
        %v1908 = vmul.bf16 %v1844, 1045249613
        %v1909 = vmul.bf16 %v1845, 1045249613
        %v1910 = vmul.bf16 %v1846, 1045249613
        %v1911 = vmul.bf16 %v1847, 1045249613
        %v1912 = vmul.bf16 %v1848, 1045249613
        %v1913 = vmul.bf16 %v1849, 1045249613
        %v1914 = vmul.bf16 %v1850, 1045249613
        %v1915 = vmul.bf16 %v1851, 1045249613
        %v1916 = vmul.bf16 %v1852, 1045249613
        %v1917 = vmul.bf16 %v1853, 1045249613
        %v1918 = vmul.bf16 %v1854, 1045249613
        %v1919 = vmul.bf16 %v1855, 1045249613
        %v1920 = vmul.bf16 %v1856, 1045249613
        %v1921 = vmul.bf16 %v1857, 1045249613
        %v1922 = vmul.bf16 %v1858, 1045249613
        %v1923 = vmul.bf16 %v1859, 1045249613
        %v1924 = vmul.bf16 %v1860, 1045249613
        %v1925 = vmul.bf16 %v1861, 1045249613
        %v1926 = vmul.bf16 %v1862, 1045249613
        %v1927 = vmul.bf16 %v1863, 1045249613
        %v1928 = vmul.bf16 %v1864, 1045249613
        %v1929 = vmul.bf16 %v1865, 1045249613
        %v1930 = vmul.bf16 %v1866, 1045249613
        %v1931 = vmul.bf16 %v1867, 1045249613
        %v1932 = vmul.bf16 %v1868, 1045249613
        %v1933 = vmul.bf16 %v1869, 1045249613
        %v1934 = vmul.bf16 %v1870, 1045249613
        %v1935 = vmul.bf16 %v1871, 1045249613
        %v1936 = vmul.bf16 %v1872, 1045249613
        %v1937 = vmul.bf16 %v1873, 1045249613
        %v1938 = vmax.bf16 %v1810, %v1874
        %v1939 = vmax.bf16 %v1811, %v1875
        %v1940 = vmax.bf16 %v1812, %v1876
        %v1941 = vmax.bf16 %v1813, %v1877
        %v1942 = vmax.bf16 %v1814, %v1878
        %v1943 = vmax.bf16 %v1815, %v1879
        %v1944 = vmax.bf16 %v1816, %v1880
        %v1945 = vmax.bf16 %v1817, %v1881
        %v1946 = vmax.bf16 %v1818, %v1882
        %v1947 = vmax.bf16 %v1819, %v1883
        %v1948 = vmax.bf16 %v1820, %v1884
        %v1949 = vmax.bf16 %v1821, %v1885
        %v1950 = vmax.bf16 %v1822, %v1886
        %v1951 = vmax.bf16 %v1823, %v1887
        %v1952 = vmax.bf16 %v1824, %v1888
        %v1953 = vmax.bf16 %v1825, %v1889
        %v1954 = vmax.bf16 %v1826, %v1890
        %v1955 = vmax.bf16 %v1827, %v1891
        %v1956 = vmax.bf16 %v1828, %v1892
        %v1957 = vmax.bf16 %v1829, %v1893
        %v1958 = vmax.bf16 %v1830, %v1894
        %v1959 = vmax.bf16 %v1831, %v1895
        %v1960 = vmax.bf16 %v1832, %v1896
        %v1961 = vmax.bf16 %v1833, %v1897
        %v1962 = vmax.bf16 %v1834, %v1898
        %v1963 = vmax.bf16 %v1835, %v1899
        %v1964 = vmax.bf16 %v1836, %v1900
        %v1965 = vmax.bf16 %v1837, %v1901
        %v1966 = vmax.bf16 %v1838, %v1902
        %v1967 = vmax.bf16 %v1839, %v1903
        %v1968 = vmax.bf16 %v1840, %v1904
        %v1969 = vmax.bf16 %v1841, %v1905
        %v1970 = vmax.bf16 %v1842, %v1906
        %v1971 = vmax.bf16 %v1843, %v1907
        %v1972 = vmax.bf16 %v1844, %v1908
        %v1973 = vmax.bf16 %v1845, %v1909
        %v1974 = vmax.bf16 %v1846, %v1910
        %v1975 = vmax.bf16 %v1847, %v1911
        %v1976 = vmax.bf16 %v1848, %v1912
        %v1977 = vmax.bf16 %v1849, %v1913
        %v1978 = vmax.bf16 %v1850, %v1914
        %v1979 = vmax.bf16 %v1851, %v1915
        %v1980 = vmax.bf16 %v1852, %v1916
        %v1981 = vmax.bf16 %v1853, %v1917
        %v1982 = vmax.bf16 %v1854, %v1918
        %v1983 = vmax.bf16 %v1855, %v1919
        %v1984 = vmax.bf16 %v1856, %v1920
        %v1985 = vmax.bf16 %v1857, %v1921
        %v1986 = vmax.bf16 %v1858, %v1922
        %v1987 = vmax.bf16 %v1859, %v1923
        %v1988 = vmax.bf16 %v1860, %v1924
        %v1989 = vmax.bf16 %v1861, %v1925
        %v1990 = vmax.bf16 %v1862, %v1926
        %v1991 = vmax.bf16 %v1863, %v1927
        %v1992 = vmax.bf16 %v1864, %v1928
        %v1993 = vmax.bf16 %v1865, %v1929
        %v1994 = vmax.bf16 %v1866, %v1930
        %v1995 = vmax.bf16 %v1867, %v1931
        %v1996 = vmax.bf16 %v1868, %v1932
        %v1997 = vmax.bf16 %v1869, %v1933
        %v1998 = vmax.bf16 %v1870, %v1934
        %v1999 = vmax.bf16 %v1871, %v1935
        %v2000 = vmax.bf16 %v1872, %v1936
        %v2001 = vmax.bf16 %v1873, %v1937
        %v2002 = vld [vmem:[%s3] sm:$0xf]
        %v2003 = vld [vmem:[%s3 + $0x4] sm:$0xf]
        %v2004 = vld [vmem:[%s3 + $0x8] sm:$0xf]
        %v2005 = vld [vmem:[%s3 + $0xc] sm:$0xf]
        %v2006 = vld [vmem:[%s3 + $0x10] sm:$0xf]
        %v2007 = vld [vmem:[%s3 + $0x14] sm:$0xf]
        %v2008 = vld [vmem:[%s3 + $0x18] sm:$0xf]
        %v2009 = vld [vmem:[%s3 + $0x1c] sm:$0xf]
        %v2010 = vld [vmem:[%s3 + $0x20] sm:$0xf]
        %v2011 = vld [vmem:[%s3 + $0x24] sm:$0xf]
        %v2012 = vld [vmem:[%s3 + $0x28] sm:$0xf]
        %v2013 = vld [vmem:[%s3 + $0x2c] sm:$0xf]
        %v2014 = vld [vmem:[%s3 + $0x30] sm:$0xf]
        %v2015 = vld [vmem:[%s3 + $0x34] sm:$0xf]
        %v2016 = vld [vmem:[%s3 + $0x38] sm:$0xf]
        %v2017 = vld [vmem:[%s3 + $0x3c] sm:$0xf]
        %v2018 = vld [vmem:[%s3 + $0x40] sm:$0xf]
        %v2019 = vld [vmem:[%s3 + $0x44] sm:$0xf]
        %v2020 = vld [vmem:[%s3 + $0x48] sm:$0xf]
        %v2021 = vld [vmem:[%s3 + $0x4c] sm:$0xf]
        %v2022 = vld [vmem:[%s3 + $0x50] sm:$0xf]
        %v2023 = vld [vmem:[%s3 + $0x54] sm:$0xf]
        %v2024 = vld [vmem:[%s3 + $0x58] sm:$0xf]
        %v2025 = vld [vmem:[%s3 + $0x5c] sm:$0xf]
        %v2026 = vld [vmem:[%s3 + $0x60] sm:$0xf]
        %v2027 = vld [vmem:[%s3 + $0x64] sm:$0xf]
        %v2028 = vld [vmem:[%s3 + $0x68] sm:$0xf]
        %v2029 = vld [vmem:[%s3 + $0x6c] sm:$0xf]
        %v2030 = vld [vmem:[%s3 + $0x70] sm:$0xf]
        %v2031 = vld [vmem:[%s3 + $0x74] sm:$0xf]
        %v2032 = vld [vmem:[%s3 + $0x78] sm:$0xf]
        %v2033 = vld [vmem:[%s3 + $0x7c] sm:$0xf]
        %v2034 = vld [vmem:[%s3 + $0x80] sm:$0xf]
        %v2035 = vld [vmem:[%s3 + $0x84] sm:$0xf]
        %v2036 = vld [vmem:[%s3 + $0x88] sm:$0xf]
        %v2037 = vld [vmem:[%s3 + $0x8c] sm:$0xf]
        %v2038 = vld [vmem:[%s3 + $0x90] sm:$0xf]
        %v2039 = vld [vmem:[%s3 + $0x94] sm:$0xf]
        %v2040 = vld [vmem:[%s3 + $0x98] sm:$0xf]
        %v2041 = vld [vmem:[%s3 + $0x9c] sm:$0xf]
        %v2042 = vld [vmem:[%s3 + $0xa0] sm:$0xf]
        %v2043 = vld [vmem:[%s3 + $0xa4] sm:$0xf]
        %v2044 = vld [vmem:[%s3 + $0xa8] sm:$0xf]
        %v2045 = vld [vmem:[%s3 + $0xac] sm:$0xf]
        %v2046 = vld [vmem:[%s3 + $0xb0] sm:$0xf]
        %v2047 = vld [vmem:[%s3 + $0xb4] sm:$0xf]
        %v2048 = vld [vmem:[%s3 + $0xb8] sm:$0xf]
        %v2049 = vld [vmem:[%s3 + $0xbc] sm:$0xf]
        %v2050 = vld [vmem:[%s3 + $0xc0] sm:$0xf]
        %v2051 = vld [vmem:[%s3 + $0xc4] sm:$0xf]
        %v2052 = vld [vmem:[%s3 + $0xc8] sm:$0xf]
        %v2053 = vld [vmem:[%s3 + $0xcc] sm:$0xf]
        %v2054 = vld [vmem:[%s3 + $0xd0] sm:$0xf]
        %v2055 = vld [vmem:[%s3 + $0xd4] sm:$0xf]
        %v2056 = vld [vmem:[%s3 + $0xd8] sm:$0xf]
        %v2057 = vld [vmem:[%s3 + $0xdc] sm:$0xf]
        %v2058 = vld [vmem:[%s3 + $0xe0] sm:$0xf]
        %v2059 = vld [vmem:[%s3 + $0xe4] sm:$0xf]
        %v2060 = vld [vmem:[%s3 + $0xe8] sm:$0xf]
        %v2061 = vld [vmem:[%s3 + $0xec] sm:$0xf]
        %v2062 = vld [vmem:[%s3 + $0xf0] sm:$0xf]
        %v2063 = vld [vmem:[%s3 + $0xf4] sm:$0xf]
        %v2064 = vld [vmem:[%s3 + $0xf8] sm:$0xf]
        %v2065 = vld [vmem:[%s3 + $0xfc] sm:$0xf]
        %v2066 = vld [vmem:[%s4] sm:$0x1]
        %v2068 = vlaneseq
        %v2069 = vshrl.u32 %v2068, 7
        %v2070 = vsub.s32 0, %v2069
        %v2071 = vrot.slane %v2066, %v2070
        %v2137 = vunpack.c.l.b16 %v2002
        %v2138 = vunpack.c.l.b16 %v2003
        %v2139 = vunpack.c.l.b16 %v2004
        %v2140 = vunpack.c.l.b16 %v2005
        %v2141 = vunpack.c.l.b16 %v2006
        %v2142 = vunpack.c.l.b16 %v2007
        %v2143 = vunpack.c.l.b16 %v2008
        %v2144 = vunpack.c.l.b16 %v2009
        %v2145 = vunpack.c.l.b16 %v2010
        %v2146 = vunpack.c.l.b16 %v2011
        %v2147 = vunpack.c.l.b16 %v2012
        %v2148 = vunpack.c.l.b16 %v2013
        %v2149 = vunpack.c.l.b16 %v2014
        %v2150 = vunpack.c.l.b16 %v2015
        %v2151 = vunpack.c.l.b16 %v2016
        %v2152 = vunpack.c.l.b16 %v2017
        %v2153 = vunpack.c.l.b16 %v2018
        %v2154 = vunpack.c.l.b16 %v2019
        %v2155 = vunpack.c.l.b16 %v2020
        %v2156 = vunpack.c.l.b16 %v2021
        %v2157 = vunpack.c.l.b16 %v2022
        %v2158 = vunpack.c.l.b16 %v2023
        %v2159 = vunpack.c.l.b16 %v2024
        %v2160 = vunpack.c.l.b16 %v2025
        %v2161 = vunpack.c.l.b16 %v2026
        %v2162 = vunpack.c.l.b16 %v2027
        %v2163 = vunpack.c.l.b16 %v2028
        %v2164 = vunpack.c.l.b16 %v2029
        %v2165 = vunpack.c.l.b16 %v2030
        %v2166 = vunpack.c.l.b16 %v2031
        %v2167 = vunpack.c.l.b16 %v2032
        %v2168 = vunpack.c.l.b16 %v2033
        %v2169 = vunpack.c.l.b16 %v2034
        %v2170 = vunpack.c.l.b16 %v2035
        %v2171 = vunpack.c.l.b16 %v2036
        %v2172 = vunpack.c.l.b16 %v2037
        %v2173 = vunpack.c.l.b16 %v2038
        %v2174 = vunpack.c.l.b16 %v2039
        %v2175 = vunpack.c.l.b16 %v2040
        %v2176 = vunpack.c.l.b16 %v2041
        %v2177 = vunpack.c.l.b16 %v2042
        %v2178 = vunpack.c.l.b16 %v2043
        %v2179 = vunpack.c.l.b16 %v2044
        %v2180 = vunpack.c.l.b16 %v2045
        %v2181 = vunpack.c.l.b16 %v2046
        %v2182 = vunpack.c.l.b16 %v2047
        %v2183 = vunpack.c.l.b16 %v2048
        %v2184 = vunpack.c.l.b16 %v2049
        %v2185 = vunpack.c.l.b16 %v2050
        %v2186 = vunpack.c.l.b16 %v2051
        %v2187 = vunpack.c.l.b16 %v2052
        %v2188 = vunpack.c.l.b16 %v2053
        %v2189 = vunpack.c.l.b16 %v2054
        %v2190 = vunpack.c.l.b16 %v2055
        %v2191 = vunpack.c.l.b16 %v2056
        %v2192 = vunpack.c.l.b16 %v2057
        %v2193 = vunpack.c.l.b16 %v2058
        %v2194 = vunpack.c.l.b16 %v2059
        %v2195 = vunpack.c.l.b16 %v2060
        %v2196 = vunpack.c.l.b16 %v2061
        %v2197 = vunpack.c.l.b16 %v2062
        %v2198 = vunpack.c.l.b16 %v2063
        %v2199 = vunpack.c.l.b16 %v2064
        %v2200 = vunpack.c.l.b16 %v2065
        %v2201 = vpack.c.b16 %v2138, %v2137
        %v2202 = vpack.c.b16 %v2140, %v2139
        %v2203 = vpack.c.b16 %v2142, %v2141
        %v2204 = vpack.c.b16 %v2144, %v2143
        %v2205 = vpack.c.b16 %v2146, %v2145
        %v2206 = vpack.c.b16 %v2148, %v2147
        %v2207 = vpack.c.b16 %v2150, %v2149
        %v2208 = vpack.c.b16 %v2152, %v2151
        %v2209 = vpack.c.b16 %v2154, %v2153
        %v2210 = vpack.c.b16 %v2156, %v2155
        %v2211 = vpack.c.b16 %v2158, %v2157
        %v2212 = vpack.c.b16 %v2160, %v2159
        %v2213 = vpack.c.b16 %v2162, %v2161
        %v2214 = vpack.c.b16 %v2164, %v2163
        %v2215 = vpack.c.b16 %v2166, %v2165
        %v2216 = vpack.c.b16 %v2168, %v2167
        %v2217 = vpack.c.b16 %v2170, %v2169
        %v2218 = vpack.c.b16 %v2172, %v2171
        %v2219 = vpack.c.b16 %v2174, %v2173
        %v2220 = vpack.c.b16 %v2176, %v2175
        %v2221 = vpack.c.b16 %v2178, %v2177
        %v2222 = vpack.c.b16 %v2180, %v2179
        %v2223 = vpack.c.b16 %v2182, %v2181
        %v2224 = vpack.c.b16 %v2184, %v2183
        %v2225 = vpack.c.b16 %v2186, %v2185
        %v2226 = vpack.c.b16 %v2188, %v2187
        %v2227 = vpack.c.b16 %v2190, %v2189
        %v2228 = vpack.c.b16 %v2192, %v2191
        %v2229 = vpack.c.b16 %v2194, %v2193
        %v2230 = vpack.c.b16 %v2196, %v2195
        %v2231 = vpack.c.b16 %v2198, %v2197
        %v2232 = vpack.c.b16 %v2200, %v2199
        %2265 = vmatprep.subr.bf16.mxu0 0
        %2266 = vmatpush1.bf16.msra.mxu0 %v2208
        %2267 = vmatprep.subr.bf16.mxu0 0
        %2268 = vmatpush1.bf16.msra.mxu0 %v2207
        %2269 = vmatprep.subr.bf16.mxu0 0
        %2270 = vmatpush1.bf16.msra.mxu0 %v2206
        %2271 = vmatprep.subr.bf16.mxu0 0
        %2272 = vmatpush1.bf16.msra.mxu0 %v2205
        %2273 = vmatprep.subr.bf16.mxu0 0
        %2274 = vmatpush1.bf16.msra.mxu0 %v2204
        %2275 = vmatprep.subr.bf16.mxu0 0
        %2276 = vmatpush1.bf16.msra.mxu0 %v2203
        %2277 = vmatprep.subr.bf16.mxu0 0
        %2278 = vmatpush1.bf16.msra.mxu0 %v2202
        %2279 = vmatprep.subr.bf16.mxu0 0
        %2280 = vmatpush1.bf16.msra.mxu0 %v2201
        %2281 = vmatprep.subr.bf16.mxu0 0
        %2282 = vmatpush2.bf16.msra.mxu0 %v2216
        %2283 = vmatprep.subr.bf16.mxu0 0
        %2284 = vmatpush2.bf16.msra.mxu0 %v2215
        %2285 = vmatprep.subr.bf16.mxu0 0
        %2286 = vmatpush2.bf16.msra.mxu0 %v2214
        %2287 = vmatprep.subr.bf16.mxu0 0
        %2288 = vmatpush2.bf16.msra.mxu0 %v2213
        %2289 = vmatprep.subr.bf16.mxu0 0
        %2290 = vmatpush2.bf16.msra.mxu0 %v2212
        %2291 = vmatprep.subr.bf16.mxu0 0
        %2292 = vmatpush2.bf16.msra.mxu0 %v2211
        %2293 = vmatprep.subr.bf16.mxu0 0
        %2294 = vmatpush2.bf16.msra.mxu0 %v2210
        %2295 = vmatprep.subr.bf16.mxu0 0
        %2296 = vmatpush2.bf16.msra.mxu0 %v2209
        %2297 = vmatprep.mubr.bf16.mxu0 %v1939
        %2298 = vmatmul.mubr.bf16.gmra.mxu0 %v1938
        %v2299 = vpop.f32.mrf.mxu0
        %v2300 = vadd.f32 %v2071, %v2299
        %v2301 = vpop.f32.mrf.mxu0
        %v2302 = vpop.f32.mrf.mxu0
        %v2303 = vadd.f32 %v2071, %v2302
        %v2304 = vpop.f32.mrf.mxu0
        %2305 = vmatprep.mubr.bf16.mxu0 %v1943
        %2306 = vmatmul.mubr.bf16.gmra.mxu0 %v1942
        %v2307 = vpop.f32.mrf.mxu0
        %v2308 = vadd.f32 %v2071, %v2307
        %v2309 = vpop.f32.mrf.mxu0
        %v2310 = vpop.f32.mrf.mxu0
        %v2311 = vadd.f32 %v2071, %v2310
        %v2312 = vpop.f32.mrf.mxu0
        %2313 = vmatprep.mubr.bf16.mxu0 %v1947
        %2314 = vmatmul.mubr.bf16.gmra.mxu0 %v1946
        %v2315 = vpop.f32.mrf.mxu0
        %v2316 = vadd.f32 %v2071, %v2315
        %v2317 = vpop.f32.mrf.mxu0
        %v2318 = vpop.f32.mrf.mxu0
        %v2319 = vadd.f32 %v2071, %v2318
        %v2320 = vpop.f32.mrf.mxu0
        %2321 = vmatprep.mubr.bf16.mxu0 %v1951
        %2322 = vmatmul.mubr.bf16.gmra.mxu0 %v1950
        %v2323 = vpop.f32.mrf.mxu0
        %v2324 = vadd.f32 %v2071, %v2323
        %v2325 = vpop.f32.mrf.mxu0
        %v2326 = vpop.f32.mrf.mxu0
        %v2327 = vadd.f32 %v2071, %v2326
        %v2328 = vpop.f32.mrf.mxu0
        %2329 = vmatprep.mubr.bf16.mxu0 %v1955
        %2330 = vmatmul.mubr.bf16.gmra.mxu0 %v1954
        %v2331 = vpop.f32.mrf.mxu0
        %v2332 = vadd.f32 %v2071, %v2331
        %v2333 = vpop.f32.mrf.mxu0
        %v2334 = vpop.f32.mrf.mxu0
        %v2335 = vadd.f32 %v2071, %v2334
        %v2336 = vpop.f32.mrf.mxu0
        %2337 = vmatprep.mubr.bf16.mxu0 %v1959
        %2338 = vmatmul.mubr.bf16.gmra.mxu0 %v1958
        %v2339 = vpop.f32.mrf.mxu0
        %v2340 = vadd.f32 %v2071, %v2339
        %v2341 = vpop.f32.mrf.mxu0
        %v2342 = vpop.f32.mrf.mxu0
        %v2343 = vadd.f32 %v2071, %v2342
        %v2344 = vpop.f32.mrf.mxu0
        %2345 = vmatprep.mubr.bf16.mxu0 %v1963
        %2346 = vmatmul.mubr.bf16.gmra.mxu0 %v1962
        %v2347 = vpop.f32.mrf.mxu0
        %v2348 = vadd.f32 %v2071, %v2347
        %v2349 = vpop.f32.mrf.mxu0
        %v2350 = vpop.f32.mrf.mxu0
        %v2351 = vadd.f32 %v2071, %v2350
        %v2352 = vpop.f32.mrf.mxu0
        %2353 = vmatprep.mubr.bf16.mxu0 %v1967
        %2354 = vmatmul.mubr.bf16.gmra.mxu0 %v1966
        %v2355 = vpop.f32.mrf.mxu0
        %v2356 = vadd.f32 %v2071, %v2355
        %v2357 = vpop.f32.mrf.mxu0
        %v2358 = vpop.f32.mrf.mxu0
        %v2359 = vadd.f32 %v2071, %v2358
        %v2360 = vpop.f32.mrf.mxu0
        %2361 = vmatprep.mubr.bf16.mxu0 %v1971
        %2362 = vmatmul.mubr.bf16.gmra.mxu0 %v1970
        %v2363 = vpop.f32.mrf.mxu0
        %v2364 = vadd.f32 %v2071, %v2363
        %v2365 = vpop.f32.mrf.mxu0
        %v2366 = vpop.f32.mrf.mxu0
        %v2367 = vadd.f32 %v2071, %v2366
        %v2368 = vpop.f32.mrf.mxu0
        %2369 = vmatprep.mubr.bf16.mxu0 %v1975
        %2370 = vmatmul.mubr.bf16.gmra.mxu0 %v1974
        %v2371 = vpop.f32.mrf.mxu0
        %v2372 = vadd.f32 %v2071, %v2371
        %v2373 = vpop.f32.mrf.mxu0
        %v2374 = vpop.f32.mrf.mxu0
        %v2375 = vadd.f32 %v2071, %v2374
        %v2376 = vpop.f32.mrf.mxu0
        %2377 = vmatprep.mubr.bf16.mxu0 %v1979
        %2378 = vmatmul.mubr.bf16.gmra.mxu0 %v1978
        %v2379 = vpop.f32.mrf.mxu0
        %v2380 = vadd.f32 %v2071, %v2379
        %v2381 = vpop.f32.mrf.mxu0
        %v2382 = vpop.f32.mrf.mxu0
        %v2383 = vadd.f32 %v2071, %v2382
        %v2384 = vpop.f32.mrf.mxu0
        %2385 = vmatprep.mubr.bf16.mxu0 %v1983
        %2386 = vmatmul.mubr.bf16.gmra.mxu0 %v1982
        %v2387 = vpop.f32.mrf.mxu0
        %v2388 = vadd.f32 %v2071, %v2387
        %v2389 = vpop.f32.mrf.mxu0
        %v2390 = vpop.f32.mrf.mxu0
        %v2391 = vadd.f32 %v2071, %v2390
        %v2392 = vpop.f32.mrf.mxu0
        %2393 = vmatprep.mubr.bf16.mxu0 %v1987
        %2394 = vmatmul.mubr.bf16.gmra.mxu0 %v1986
        %v2395 = vpop.f32.mrf.mxu0
        %v2396 = vadd.f32 %v2071, %v2395
        %v2397 = vpop.f32.mrf.mxu0
        %v2398 = vpop.f32.mrf.mxu0
        %v2399 = vadd.f32 %v2071, %v2398
        %v2400 = vpop.f32.mrf.mxu0
        %2401 = vmatprep.mubr.bf16.mxu0 %v1991
        %2402 = vmatmul.mubr.bf16.gmra.mxu0 %v1990
        %v2403 = vpop.f32.mrf.mxu0
        %v2404 = vadd.f32 %v2071, %v2403
        %v2405 = vpop.f32.mrf.mxu0
        %v2406 = vpop.f32.mrf.mxu0
        %v2407 = vadd.f32 %v2071, %v2406
        %v2408 = vpop.f32.mrf.mxu0
        %2409 = vmatprep.mubr.bf16.mxu0 %v1995
        %2410 = vmatmul.mubr.bf16.gmra.mxu0 %v1994
        %v2411 = vpop.f32.mrf.mxu0
        %v2412 = vadd.f32 %v2071, %v2411
        %v2413 = vpop.f32.mrf.mxu0
        %v2414 = vpop.f32.mrf.mxu0
        %v2415 = vadd.f32 %v2071, %v2414
        %v2416 = vpop.f32.mrf.mxu0
        %2417 = vmatprep.mubr.bf16.mxu0 %v1999
        %2418 = vmatmul.mubr.bf16.gmra.mxu0 %v1998
        %v2419 = vpop.f32.mrf.mxu0
        %v2420 = vadd.f32 %v2071, %v2419
        %v2421 = vpop.f32.mrf.mxu0
        %v2422 = vpop.f32.mrf.mxu0
        %v2423 = vadd.f32 %v2071, %v2422
        %v2424 = vpop.f32.mrf.mxu0
        %2425 = vdwg.mxu0
        %2426 = vmatprep.subr.bf16.mxu0 0
        %2427 = vmatpush1.bf16.msra.mxu0 %v2224
        %2428 = vmatprep.subr.bf16.mxu0 0
        %2429 = vmatpush1.bf16.msra.mxu0 %v2223
        %2430 = vmatprep.subr.bf16.mxu0 0
        %2431 = vmatpush1.bf16.msra.mxu0 %v2222
        %2432 = vmatprep.subr.bf16.mxu0 0
        %2433 = vmatpush1.bf16.msra.mxu0 %v2221
        %2434 = vmatprep.subr.bf16.mxu0 0
        %2435 = vmatpush1.bf16.msra.mxu0 %v2220
        %2436 = vmatprep.subr.bf16.mxu0 0
        %2437 = vmatpush1.bf16.msra.mxu0 %v2219
        %2438 = vmatprep.subr.bf16.mxu0 0
        %2439 = vmatpush1.bf16.msra.mxu0 %v2218
        %2440 = vmatprep.subr.bf16.mxu0 0
        %2441 = vmatpush1.bf16.msra.mxu0 %v2217
        %2442 = vmatprep.subr.bf16.mxu0 0
        %2443 = vmatpush2.bf16.msra.mxu0 %v2232
        %2444 = vmatprep.subr.bf16.mxu0 0
        %2445 = vmatpush2.bf16.msra.mxu0 %v2231
        %2446 = vmatprep.subr.bf16.mxu0 0
        %2447 = vmatpush2.bf16.msra.mxu0 %v2230
        %2448 = vmatprep.subr.bf16.mxu0 0
        %2449 = vmatpush2.bf16.msra.mxu0 %v2229
        %2450 = vmatprep.subr.bf16.mxu0 0
        %2451 = vmatpush2.bf16.msra.mxu0 %v2228
        %2452 = vmatprep.subr.bf16.mxu0 0
        %2453 = vmatpush2.bf16.msra.mxu0 %v2227
        %2454 = vmatprep.subr.bf16.mxu0 0
        %2455 = vmatpush2.bf16.msra.mxu0 %v2226
        %2456 = vmatprep.subr.bf16.mxu0 0
        %2457 = vmatpush2.bf16.msra.mxu0 %v2225
        %2458 = vmatprep.mubr.bf16.mxu0 %v1941
        %2459 = vmatmul.mubr.bf16.gmra.mxu0 %v1940
        %v2460 = vpop.f32.mrf.mxu0
        %v2461 = vadd.f32 %v2300, %v2460
        %v2462 = vpop.f32.mrf.mxu0
        %v2463 = vpop.f32.mrf.mxu0
        %v2464 = vadd.f32 %v2303, %v2463
        %v2465 = vpop.f32.mrf.mxu0
        %2466 = vmatprep.mubr.bf16.mxu0 %v1945
        %2467 = vmatmul.mubr.bf16.gmra.mxu0 %v1944
        %v2468 = vpop.f32.mrf.mxu0
        %v2469 = vadd.f32 %v2308, %v2468
        %v2470 = vpop.f32.mrf.mxu0
        %v2471 = vpop.f32.mrf.mxu0
        %v2472 = vadd.f32 %v2311, %v2471
        %v2473 = vpop.f32.mrf.mxu0
        %2474 = vmatprep.mubr.bf16.mxu0 %v1949
        %2475 = vmatmul.mubr.bf16.gmra.mxu0 %v1948
        %v2476 = vpop.f32.mrf.mxu0
        %v2477 = vadd.f32 %v2316, %v2476
        %v2478 = vpop.f32.mrf.mxu0
        %v2479 = vpop.f32.mrf.mxu0
        %v2480 = vadd.f32 %v2319, %v2479
        %v2481 = vpop.f32.mrf.mxu0
        %2482 = vmatprep.mubr.bf16.mxu0 %v1953
        %2483 = vmatmul.mubr.bf16.gmra.mxu0 %v1952
        %v2484 = vpop.f32.mrf.mxu0
        %v2485 = vadd.f32 %v2324, %v2484
        %v2486 = vpop.f32.mrf.mxu0
        %v2487 = vpop.f32.mrf.mxu0
        %v2488 = vadd.f32 %v2327, %v2487
        %v2489 = vpop.f32.mrf.mxu0
        %2490 = vmatprep.mubr.bf16.mxu0 %v1957
        %2491 = vmatmul.mubr.bf16.gmra.mxu0 %v1956
        %v2492 = vpop.f32.mrf.mxu0
        %v2493 = vadd.f32 %v2332, %v2492
        %v2494 = vpop.f32.mrf.mxu0
        %v2495 = vpop.f32.mrf.mxu0
        %v2496 = vadd.f32 %v2335, %v2495
        %v2497 = vpop.f32.mrf.mxu0
        %2498 = vmatprep.mubr.bf16.mxu0 %v1961
        %2499 = vmatmul.mubr.bf16.gmra.mxu0 %v1960
        %v2500 = vpop.f32.mrf.mxu0
        %v2501 = vadd.f32 %v2340, %v2500
        %v2502 = vpop.f32.mrf.mxu0
        %v2503 = vpop.f32.mrf.mxu0
        %v2504 = vadd.f32 %v2343, %v2503
        %v2505 = vpop.f32.mrf.mxu0
        %2506 = vmatprep.mubr.bf16.mxu0 %v1965
        %2507 = vmatmul.mubr.bf16.gmra.mxu0 %v1964
        %v2508 = vpop.f32.mrf.mxu0
        %v2509 = vadd.f32 %v2348, %v2508
        %v2510 = vpop.f32.mrf.mxu0
        %v2511 = vpop.f32.mrf.mxu0
        %v2512 = vadd.f32 %v2351, %v2511
        %v2513 = vpop.f32.mrf.mxu0
        %2514 = vmatprep.mubr.bf16.mxu0 %v1969
        %2515 = vmatmul.mubr.bf16.gmra.mxu0 %v1968
        %v2516 = vpop.f32.mrf.mxu0
        %v2517 = vadd.f32 %v2356, %v2516
        %v2518 = vpop.f32.mrf.mxu0
        %v2519 = vpop.f32.mrf.mxu0
        %v2520 = vadd.f32 %v2359, %v2519
        %v2521 = vpop.f32.mrf.mxu0
        %2522 = vmatprep.mubr.bf16.mxu0 %v1973
        %2523 = vmatmul.mubr.bf16.gmra.mxu0 %v1972
        %v2524 = vpop.f32.mrf.mxu0
        %v2525 = vadd.f32 %v2364, %v2524
        %v2526 = vpop.f32.mrf.mxu0
        %v2527 = vpop.f32.mrf.mxu0
        %v2528 = vadd.f32 %v2367, %v2527
        %v2529 = vpop.f32.mrf.mxu0
        %2530 = vmatprep.mubr.bf16.mxu0 %v1977
        %2531 = vmatmul.mubr.bf16.gmra.mxu0 %v1976
        %v2532 = vpop.f32.mrf.mxu0
        %v2533 = vadd.f32 %v2372, %v2532
        %v2534 = vpop.f32.mrf.mxu0
        %v2535 = vpop.f32.mrf.mxu0
        %v2536 = vadd.f32 %v2375, %v2535
        %v2537 = vpop.f32.mrf.mxu0
        %2538 = vmatprep.mubr.bf16.mxu0 %v1981
        %2539 = vmatmul.mubr.bf16.gmra.mxu0 %v1980
        %v2540 = vpop.f32.mrf.mxu0
        %v2541 = vadd.f32 %v2380, %v2540
        %v2542 = vpop.f32.mrf.mxu0
        %v2543 = vpop.f32.mrf.mxu0
        %v2544 = vadd.f32 %v2383, %v2543
        %v2545 = vpop.f32.mrf.mxu0
        %2546 = vmatprep.mubr.bf16.mxu0 %v1985
        %2547 = vmatmul.mubr.bf16.gmra.mxu0 %v1984
        %v2548 = vpop.f32.mrf.mxu0
        %v2549 = vadd.f32 %v2388, %v2548
        %v2550 = vpop.f32.mrf.mxu0
        %v2551 = vpop.f32.mrf.mxu0
        %v2552 = vadd.f32 %v2391, %v2551
        %v2553 = vpop.f32.mrf.mxu0
        %2554 = vmatprep.mubr.bf16.mxu0 %v1989
        %2555 = vmatmul.mubr.bf16.gmra.mxu0 %v1988
        %v2556 = vpop.f32.mrf.mxu0
        %v2557 = vadd.f32 %v2396, %v2556
        %v2558 = vpop.f32.mrf.mxu0
        %v2559 = vpop.f32.mrf.mxu0
        %v2560 = vadd.f32 %v2399, %v2559
        %v2561 = vpop.f32.mrf.mxu0
        %2562 = vmatprep.mubr.bf16.mxu0 %v1993
        %2563 = vmatmul.mubr.bf16.gmra.mxu0 %v1992
        %v2564 = vpop.f32.mrf.mxu0
        %v2565 = vadd.f32 %v2404, %v2564
        %v2566 = vpop.f32.mrf.mxu0
        %v2567 = vpop.f32.mrf.mxu0
        %v2568 = vadd.f32 %v2407, %v2567
        %v2569 = vpop.f32.mrf.mxu0
        %2570 = vmatprep.mubr.bf16.mxu0 %v1997
        %2571 = vmatmul.mubr.bf16.gmra.mxu0 %v1996
        %v2572 = vpop.f32.mrf.mxu0
        %v2573 = vadd.f32 %v2412, %v2572
        %v2574 = vpop.f32.mrf.mxu0
        %v2575 = vpop.f32.mrf.mxu0
        %v2576 = vadd.f32 %v2415, %v2575
        %v2577 = vpop.f32.mrf.mxu0
        %2578 = vmatprep.mubr.bf16.mxu0 %v2001
        %2579 = vmatmul.mubr.bf16.gmra.mxu0 %v2000
        %v2580 = vpop.f32.mrf.mxu0
        %v2581 = vadd.f32 %v2420, %v2580
        %v2582 = vpop.f32.mrf.mxu0
        %v2583 = vpop.f32.mrf.mxu0
        %v2584 = vadd.f32 %v2423, %v2583
        %v2585 = vpop.f32.mrf.mxu0
        %2586 = vdwg.mxu0
        %v2587 = vmul.f32 %v2461, 0.2
        %v2588 = vmul.f32 %v2464, 0.2
        %v2589 = vmul.f32 %v2469, 0.2
        %v2590 = vmul.f32 %v2472, 0.2
        %v2591 = vmul.f32 %v2477, 0.2
        %v2592 = vmul.f32 %v2480, 0.2
        %v2593 = vmul.f32 %v2485, 0.2
        %v2594 = vmul.f32 %v2488, 0.2
        %v2595 = vmul.f32 %v2493, 0.2
        %v2596 = vmul.f32 %v2496, 0.2
        %v2597 = vmul.f32 %v2501, 0.2
        %v2598 = vmul.f32 %v2504, 0.2
        %v2599 = vmul.f32 %v2509, 0.2
        %v2600 = vmul.f32 %v2512, 0.2
        %v2601 = vmul.f32 %v2517, 0.2
        %v2602 = vmul.f32 %v2520, 0.2
        %v2603 = vmul.f32 %v2525, 0.2
        %v2604 = vmul.f32 %v2528, 0.2
        %v2605 = vmul.f32 %v2533, 0.2
        %v2606 = vmul.f32 %v2536, 0.2
        %v2607 = vmul.f32 %v2541, 0.2
        %v2608 = vmul.f32 %v2544, 0.2
        %v2609 = vmul.f32 %v2549, 0.2
        %v2610 = vmul.f32 %v2552, 0.2
        %v2611 = vmul.f32 %v2557, 0.2
        %v2612 = vmul.f32 %v2560, 0.2
        %v2613 = vmul.f32 %v2565, 0.2
        %v2614 = vmul.f32 %v2568, 0.2
        %v2615 = vmul.f32 %v2573, 0.2
        %v2616 = vmul.f32 %v2576, 0.2
        %v2617 = vmul.f32 %v2581, 0.2
        %v2618 = vmul.f32 %v2584, 0.2
        %v2619 = vmax.f32 %v2461, %v2587
        %v2620 = vmax.f32 %v2464, %v2588
        %v2621 = vmax.f32 %v2469, %v2589
        %v2622 = vmax.f32 %v2472, %v2590
        %v2623 = vmax.f32 %v2477, %v2591
        %v2624 = vmax.f32 %v2480, %v2592
        %v2625 = vmax.f32 %v2485, %v2593
        %v2626 = vmax.f32 %v2488, %v2594
        %v2627 = vmax.f32 %v2493, %v2595
        %v2628 = vmax.f32 %v2496, %v2596
        %v2629 = vmax.f32 %v2501, %v2597
        %v2630 = vmax.f32 %v2504, %v2598
        %v2631 = vmax.f32 %v2509, %v2599
        %v2632 = vmax.f32 %v2512, %v2600
        %v2633 = vmax.f32 %v2517, %v2601
        %v2634 = vmax.f32 %v2520, %v2602
        %v2635 = vmax.f32 %v2525, %v2603
        %v2636 = vmax.f32 %v2528, %v2604
        %v2637 = vmax.f32 %v2533, %v2605
        %v2638 = vmax.f32 %v2536, %v2606
        %v2639 = vmax.f32 %v2541, %v2607
        %v2640 = vmax.f32 %v2544, %v2608
        %v2641 = vmax.f32 %v2549, %v2609
        %v2642 = vmax.f32 %v2552, %v2610
        %v2643 = vmax.f32 %v2557, %v2611
        %v2644 = vmax.f32 %v2560, %v2612
        %v2645 = vmax.f32 %v2565, %v2613
        %v2646 = vmax.f32 %v2568, %v2614
        %v2647 = vmax.f32 %v2573, %v2615
        %v2648 = vmax.f32 %v2576, %v2616
        %v2649 = vmax.f32 %v2581, %v2617
        %v2650 = vmax.f32 %v2584, %v2618
        %v2651 = vld [vmem:[%s5] sm:$0x1]
        %v2652 = vpack.c.bf16 %v2620, %v2619
        %v2653 = vpack.c.bf16 %v2622, %v2621
        %v2654 = vpack.c.bf16 %v2624, %v2623
        %v2655 = vpack.c.bf16 %v2626, %v2625
        %v2656 = vpack.c.bf16 %v2628, %v2627
        %v2657 = vpack.c.bf16 %v2630, %v2629
        %v2658 = vpack.c.bf16 %v2632, %v2631
        %v2659 = vpack.c.bf16 %v2634, %v2633
        %v2660 = vpack.c.bf16 %v2636, %v2635
        %v2661 = vpack.c.bf16 %v2638, %v2637
        %v2662 = vpack.c.bf16 %v2640, %v2639
        %v2663 = vpack.c.bf16 %v2642, %v2641
        %v2664 = vpack.c.bf16 %v2644, %v2643
        %v2665 = vpack.c.bf16 %v2646, %v2645
        %v2666 = vpack.c.bf16 %v2648, %v2647
        %v2667 = vpack.c.bf16 %v2650, %v2649
        %v2668 = vld [vmem:[#allocation2] sm:$0x1]
        %2670 = vset.pattern.permute.xlu0 0
        %2671 = vperm.xlu0 %2670, %v2668
        %v2672 = vpop.permute.xlu0 %2671
        %v2674 = vlaneseq
        %v2675 = vshrl.u32 %v2674, 7
        %v2676 = vsub.s32 0, %v2675
        %v2677 = vrot.slane %v2672, %v2676
        %vm2678 = vcmask 261120
        %v2680 = vsel %vm2678, %v2651, 0
        %v2683 = vsel %vm2678, %v2652, 0
        %v2686 = vsel %vm2678, %v2653, 0
        %v2689 = vsel %vm2678, %v2654, 0
        %v2692 = vsel %vm2678, %v2655, 0
        %v2695 = vsel %vm2678, %v2656, 0
        %v2698 = vsel %vm2678, %v2657, 0
        %v2701 = vsel %vm2678, %v2658, 0
        %v2704 = vsel %vm2678, %v2659, 0
        %v2707 = vsel %vm2678, %v2660, 0
        %v2710 = vsel %vm2678, %v2661, 0
        %v2713 = vsel %vm2678, %v2662, 0
        %v2716 = vsel %vm2678, %v2663, 0
        %v2719 = vsel %vm2678, %v2664, 0
        %v2722 = vsel %vm2678, %v2665, 0
        %v2725 = vsel %vm2678, %v2666, 0
        %v2728 = vsel %vm2678, %v2667, 0
        %2730 = vmatprep.subr.bf16.mxu0 0
        %2731 = vmatpush1.bf16.xpose.msra.mxu0 %v2704
        %2732 = vmatprep.subr.bf16.mxu0 0
        %2733 = vmatpush1.bf16.xpose.msra.mxu0 %v2701
        %2734 = vmatprep.subr.bf16.mxu0 0
        %2735 = vmatpush1.bf16.xpose.msra.mxu0 %v2698
        %2736 = vmatprep.subr.bf16.mxu0 0
        %2737 = vmatpush1.bf16.xpose.msra.mxu0 %v2695
        %2738 = vmatprep.subr.bf16.mxu0 0
        %2739 = vmatpush1.bf16.xpose.msra.mxu0 %v2692
        %2740 = vmatprep.subr.bf16.mxu0 0
        %2741 = vmatpush1.bf16.xpose.msra.mxu0 %v2689
        %2742 = vmatprep.subr.bf16.mxu0 0
        %2743 = vmatpush1.bf16.xpose.msra.mxu0 %v2686
        %2744 = vmatprep.subr.bf16.mxu0 0
        %2745 = vmatpush1.bf16.xpose.msra.mxu0 %v2683
        %2746 = vmatprep.subr.bf16.mxu0 0
        %2747 = vmatpush2.bf16.xpose.msra.mxu0 %v2728
        %2748 = vmatprep.subr.bf16.mxu0 0
        %2749 = vmatpush2.bf16.xpose.msra.mxu0 %v2725
        %2750 = vmatprep.subr.bf16.mxu0 0
        %2751 = vmatpush2.bf16.xpose.msra.mxu0 %v2722
        %2752 = vmatprep.subr.bf16.mxu0 0
        %2753 = vmatpush2.bf16.xpose.msra.mxu0 %v2719
        %2754 = vmatprep.subr.bf16.mxu0 0
        %2755 = vmatpush2.bf16.xpose.msra.mxu0 %v2716
        %2756 = vmatprep.subr.bf16.mxu0 0
        %2757 = vmatpush2.bf16.xpose.msra.mxu0 %v2713
        %2758 = vmatprep.subr.bf16.mxu0 0
        %2759 = vmatpush2.bf16.xpose.msra.mxu0 %v2710
        %2760 = vmatprep.subr.bf16.mxu0 0
        %2761 = vmatpush2.bf16.xpose.msra.mxu0 %v2707
        %2762 = vmatprep.mubr.bf16.mxu0 0
        %2763 = vmatmul.mubr.bf16.gmra.mxu0 %v2680
        %v2764 = vpop.f32.mrf.mxu0
        %v2765 = vadd.f32 %v2677, %v2764
        %v2766 = vpop.f32.mrf.mxu0
        %v2767 = vadd.f32 %v2677, %v2766
        %v2768 = vpop.f32.mrf.mxu0
        %v2769 = vpop.f32.mrf.mxu0
        %2770 = vdwg.mxu0
        %v2773 = vcombine.low %v2765, %v2767
        %v2775 = vunpack.c.l.s4 1966171168
        %v2776 = vunpack.c.0.s8 %v2775
        %v2777 = vlaneseq
        %v2778 = vshrl.u32 %v2777, 7
        %v2779 = vsub.s32 %v2776, %v2778
        %v2780 = vrot.slane %v2773, %v2779
        %v2782 = vunpack.c.l.s4 1966171168
        %v2783 = vunpack.c.0.s8 %v2782
        %v2784 = vlaneseq
        %v2785 = vshrl.u32 %v2784, 7
        %v2786 = vsub.s32 %v2783, %v2785
        %v2787 = vrot.slane %v2780, %v2786
        %v2789 = vlaneseq
        %vm2790 = vcmp.ge.s32.totalorder %v2789, 0
        %vm2791 = vcmp.lt.s32.totalorder %v2789, 256
        %vm2792 = vmand %vm2790, %vm2791
        %2793 = vst.msk [vmem:[%s276] sm:$0x3] %vm2792, %v2787
        %s2794 = sand.u32 %s183, 1
        %s2795 = scalar_lea.sflag [#allocation4], %s2794
        %s2796 = sand.u32 %s183, 1
        %s2797 = smul.addr %s2796, 2
        %s2798 = scalar_lea.vmem [#allocation3], %s2797
        // Predicated region
        $region49: #{tpu_custom_call.1} parent=47 // pred_check
          %p2799 = pneg %p193
        $region50: #{tpu_custom_call.1} parent=47 // pred_check_branch
          %2801 = sbr.rel (%p2799) target = $region52
        $region51: #{tpu_custom_call.1} parent=47 // pred_region
          %s2803 = ssub.s32 32, 32
          %2804 = vsyncadd %s2795, %s2803
          %s2805 = smul.addr %s23, 2
          %s2806 = smul.addr %s2805, 16
          %s2807 = scalar_lea.hbm %s7, %s2806
          %s2809 = sshll.u32 %s2798, 4
          %s2810 = int_to_ptr.vmem [resolvable:$true] %s2809
          %2812 = dma.vmem_to_hbm [thread:$0]  %s2810, 32, %s2807, %s2795
        $region52: #{tpu_custom_call.1} parent=47 // pred_fallthru
          _
      $region48: #{tpu_custom_call.1} parent=5 // pred_fallthru
        _
      %p2813 = scmp.le.s32.totalorder 2, %s18
      // Predicated region
      $region53: #{tpu_custom_call.1} parent=5 // pred_check
        %p2814 = pneg %p2813
      $region54: #{tpu_custom_call.1} parent=5 // pred_check_branch
        %2816 = sbr.rel (%p2814) target = $region56
      $region55: #{tpu_custom_call.1} parent=5 // pred_region
        %s2817 = ssub.s32 %s18, 2
        // Predicated region
        $region57: #{tpu_custom_call.1} parent=55 // pred_check
          %p2818 = pneg %p199
        $region58: #{tpu_custom_call.1} parent=55 // pred_check_branch
          %2820 = sbr.rel (%p2818) target = $region60
        $region59: #{tpu_custom_call.1} parent=55 // pred_region
          %s2821 = sand.u32 %s184, 1
          %s2822 = scalar_lea.sflag [#allocation4], %s2821
          %s2823 = sand.u32 %s184, 1
          %s2824 = smul.addr %s2823, 2
          %s2825 = scalar_lea.vmem [#allocation3], %s2824
          %2826 = dma.done %s2822, 32
        $region60: #{tpu_custom_call.1} parent=55 // pred_fallthru
          _
      $region56: #{tpu_custom_call.1} parent=5 // pred_fallthru
        _
    $region6: #{tpu_custom_call.1} parent=1 // loop_footer
      %s22 = sadd.s32 1, %s18
    $region7: #{tpu_custom_call.1} parent=1 // loop_footer_branch
      %17 = sbr.rel target = $region3
    $region8: #{tpu_custom_call.1} parent=1 // loop_exit
      _
    %2827 = vsyncpa [#allocation4], 1
    %s2828 = scalar_lea.sflag [#allocation4], 1
    %2829 = vsyncpa %s2828, 1

</llo_original>
